<compile_context>
chip_gen: v7x
topology: tpu7x:2x2x1
jax: 0.10.0
libtpu: 0.0.40
codegen_flags: <defaults>
</compile_context>

<pallas_src>
import math
import functools

import jax
import jax.numpy as jnp
from jax import lax
from jax.experimental import pallas as pl
from jax.experimental.pallas import tpu as pltpu


def weighted_attention_kernel(
    x_ref,       # [1, S, H]       hidden states for one batch element
    bias_ref,    # [1, 1, S]       precomputed additive attention bias (f32)
    ln_g_ref,    # [1, H]          LayerNorm gamma (f32)
    ln_b_ref,    # [1, H]          LayerNorm beta  (f32)
    wqkv_ref,    # [G, H, 3*gw]    fused per-group Q|K|V weight (bf16, resident)
    bqkv_ref,    # [G, 1, 3*gw]    fused per-group Q|K|V bias   (f32, resident)
    wd_ref,      # [G, gw, H]      output dense weight, per-group rows (bf16, resident)
    bd_ref,      # [1, H]          output dense bias (f32)
    out_ref,     # [1, S, H]
    hn_ref,      # scratch [S, H]      bf16 : LayerNorm output, reused across groups
    ctx_ref,     # scratch [G, S, gw]  bf16 : per-group context stripes
    *,
    head_size, heads_per_step, num_groups, eps,
):
    g = pl.program_id(1)          # head-group index (innermost, "arbitrary")
    hd = head_size
    hps = heads_per_step
    gw = hps * hd                 # lanes per head group (128 when hd=64, hps=2)

    # ---- once per batch element: LayerNorm (f32 accumulation) --------------
    @pl.when(g == 0)
    def _():
        x = x_ref[0].astype(jnp.float32)                          # [S, H]
        mu = jnp.mean(x, axis=-1, keepdims=True)
        var = jnp.mean((x - mu) ** 2, axis=-1, keepdims=True)
        xn = (x - mu) * lax.rsqrt(var + eps)
        hn_ref[...] = (xn * ln_g_ref[...] + ln_b_ref[...]).astype(jnp.bfloat16)

    hn = hn_ref[...]                                              # [S, H] bf16

    # ---- fused Q/K/V projection for this head group (one MXU matmul, K = H) --
    qkv = jnp.dot(hn, wqkv_ref[g],
                  preferred_element_type=jnp.float32) + bqkv_ref[g]   # [S, 3*gw]
    q_all = qkv[:, :gw].astype(jnp.bfloat16)          # [S, gw]  (Q_h0 | Q_h1)
    k_all = qkv[:, gw:2 * gw].astype(jnp.bfloat16)    # [S, gw]
    v_all = qkv[:, 2 * gw:].astype(jnp.bfloat16)      # [S, gw]

    bias = bias_ref[0]                                            # [1, S] f32

    # ---- per-head scores / softmax / PV within the group (short, unrolled) --
    ctx_cols = []
    for hp in range(hps):
        q = q_all[:, hp * hd:(hp + 1) * hd]
        k = k_all[:, hp * hd:(hp + 1) * hd]
        v = v_all[:, hp * hd:(hp + 1) * hd]
        s = lax.dot_general(q, k, (((1,), (1,)), ((), ())),
                            preferred_element_type=jnp.float32)   # [S, S]
        s = s + bias
        m = jnp.max(s, axis=-1, keepdims=True)
        p = jnp.exp(s - m)                                        # unnormalized
        l = jnp.sum(p, axis=-1, keepdims=True)
        ctx = jnp.dot(p.astype(jnp.bfloat16), v,
                      preferred_element_type=jnp.float32)         # [S, hd]
        # normalize AFTER the PV matmul: [S, hd] multiply instead of [S, S].
        ctx = ctx * pl.reciprocal(l, approx=True)
        ctx_cols.append(ctx.astype(jnp.bfloat16))

    ctx_grp = jnp.concatenate(ctx_cols, axis=-1) if hps > 1 else ctx_cols[0]
    ctx_ref[g] = ctx_grp                                          # [S, gw] stripe

    # ---- last group: single output-dense pass over all resident stripes -----
    @pl.when(g == pl.num_programs(1) - 1)
    def _():
        acc = jnp.dot(ctx_ref[0], wd_ref[0],
                      preferred_element_type=jnp.float32)         # [S, H]
        for gi in range(1, num_groups):
            acc = acc + jnp.dot(ctx_ref[gi], wd_ref[gi],
                                preferred_element_type=jnp.float32)
        out_ref[0] = (acc + bd_ref[...]).astype(out_ref.dtype)


def weighted_attention(hidden_states, attention_mask, state_scores, num_dups,
                       params, *, num_heads, eps=1e-12, scale_correction=True,
                       heads_per_step=None):
    B, S, H = hidden_states.shape
    hd = H // num_heads
    if heads_per_step is None:
        heads_per_step = 2 if num_heads % 2 == 0 else 1
    hps = heads_per_step
    assert num_heads % hps == 0
    G = num_heads // hps
    gw = hps * hd
    inv_scale = 1.0 / math.sqrt(math.sqrt(hd))

    # Precompute the additive bias once: single [B, 1, S] f32 input.
    bias = -1000.0 * (1.0 - attention_mask.astype(jnp.float32))
    bias = bias + jnp.log(state_scores.astype(jnp.float32) + 1e-4)
    if scale_correction:
        bias = bias + jnp.log(num_dups.astype(jnp.float32) + 1e-4)
    bias = bias.reshape(B, 1, S)

    # Per-group fused Q|K|V weights/biases, laid out [Q_h0..Q_h{hps-1} | K... | V...]
    # (heads are contiguous output columns, so a group slab is just a column
    # range).  1/sqrt(sqrt(hd)) folded into Q and K.
    def group_w(w):      # [H, H] -> [G, H, gw]
        return w.reshape(H, G, gw).transpose(1, 0, 2)

    def group_b(b):      # [1, H] -> [G, 1, gw]
        return b.reshape(1, G, gw).transpose(1, 0, 2)

    wqkv = jnp.concatenate(
        [group_w(params["wq"] * inv_scale),
         group_w(params["wk"] * inv_scale),
         group_w(params["wv"])], axis=-1).astype(jnp.bfloat16)      # [G, H, 3*gw]
    bqkv = jnp.concatenate(
        [group_b(params["bq"] * inv_scale),
         group_b(params["bk"] * inv_scale),
         group_b(params["bv"])], axis=-1).astype(jnp.float32)       # [G, 1, 3*gw]
    wd = params["wd"].reshape(G, gw, H).astype(jnp.bfloat16)        # [G, gw, H]
    bd = params["bd"].astype(jnp.float32)                           # [1, H]
    ln_g = params["ln_g"].astype(jnp.float32)
    ln_b = params["ln_b"].astype(jnp.float32)

    kernel = functools.partial(weighted_attention_kernel,
                               head_size=hd, heads_per_step=hps,
                               num_groups=G, eps=eps)

    in_specs = [
        pl.BlockSpec((1, S, H), lambda b, g: (b, 0, 0)),            # hidden_states
        pl.BlockSpec((1, 1, S), lambda b, g: (b, 0, 0)),            # additive bias
        pl.BlockSpec((1, H), lambda b, g: (0, 0)),                  # LN gamma
        pl.BlockSpec((1, H), lambda b, g: (0, 0)),                  # LN beta
        pl.BlockSpec((G, H, 3 * gw), lambda b, g: (0, 0, 0)),       # fused QKV W (resident)
        pl.BlockSpec((G, 1, 3 * gw), lambda b, g: (0, 0, 0)),       # fused QKV b (resident)
        pl.BlockSpec((G, gw, H), lambda b, g: (0, 0, 0)),           # dense W groups (resident)
        pl.BlockSpec((1, H), lambda b, g: (0, 0)),                  # dense bias
    ]
    out_spec = pl.BlockSpec((1, S, H), lambda b, g: (b, 0, 0))

    # Derive the VMEM budget from the real footprint (headroom x2, clamped).
    x_bytes = S * H * hidden_states.dtype.itemsize
    footprint = (
        2 * 2 * x_bytes                                   # x + out blocks, double-buffered
        + 2 * 4 * S                                       # bias block
        + 2 * (wqkv.size * 2 + bqkv.size * 4 + wd.size * 2)  # resident weights
        + S * H * 2 + G * S * gw * 2                      # hn + ctx scratch (bf16)
        + 3 * 4 * S * S                                   # score / exp temporaries (f32)
        + 4 * S * H                                       # dense accumulator temporaries
    )
    vmem_limit = int(min(110 * 1024 * 1024, max(32 * 1024 * 1024, 2 * footprint)))

    return pl.pallas_call(
        kernel,
        out_shape=jax.ShapeDtypeStruct((B, S, H), hidden_states.dtype),
        grid_spec=pltpu.PrefetchScalarGridSpec(
            num_scalar_prefetch=0,
            grid=(B, G),
            in_specs=in_specs,
            out_specs=out_spec,
            scratch_shapes=[pltpu.VMEM((S, H), jnp.bfloat16),       # LN output
                            pltpu.VMEM((G, S, gw), jnp.bfloat16)]), # ctx stripes
        compiler_params=pltpu.CompilerParams(
            dimension_semantics=("parallel", "arbitrary"),
            vmem_limit_bytes=vmem_limit),
    )(hidden_states, bias, ln_g, ln_b, wqkv, bqkv, wd, bd)


def reference_weighted_attention(x, mask, ss, nd, params, *, num_heads,
                                 eps=1e-12, scale_correction=True):
    """Plain-JAX (f32) reference mirroring the PyTorch forward."""
    B, S, H = x.shape
    hd = H // num_heads
    mu = jnp.mean(x, -1, keepdims=True)
    var = jnp.mean((x - mu) ** 2, -1, keepdims=True)
    h = (x - mu) / jnp.sqrt(var + eps) * params["ln_g"][0] + params["ln_b"][0]

    def proj(w, b):
        y = h @ w + b[0]
        return y.reshape(B, S, num_heads, hd).transpose(0, 2, 1, 3).astype(jnp.float32)

    q = proj(params["wq"], params["bq"])
    k = proj(params["wk"], params["bk"])
    v = proj(params["wv"], params["bv"])
    scale = math.sqrt(math.sqrt(hd))
    s = jnp.einsum("bhqd,bhkd->bhqk", q / scale, k / scale)
    bias = -1000.0 * (1.0 - mask[:, None, None, :].astype(jnp.float32))
    bias = bias + jnp.log(ss[:, None, None, :].astype(jnp.float32) + 1e-4)
    if scale_correction:
        bias = bias + jnp.log(nd[:, None, None, :].astype(jnp.float32) + 1e-4)
    p = jax.nn.softmax(s + bias, axis=-1)
    ctx = jnp.einsum("bhqk,bhkd->bhqd", p, v).astype(x.dtype)
    ctx = ctx.transpose(0, 2, 1, 3).reshape(B, S, H)
    return ctx @ params["wd"] + params["bd"][0]


if __name__ == "__main__":
    # Small but tile-aligned shapes (head_size = 64 matches RoBERTa).
    B, S, H = 2, 128, 256
    NUM_HEADS = 4

    key = jax.random.PRNGKey(0)
    keys = jax.random.split(key, 12)

    hidden_states = jax.random.normal(keys[0], (B, S, H), jnp.float32)
    attention_mask = (jax.random.uniform(keys[1], (B, S)) > 0.2).astype(jnp.float32)
    state_scores = jax.random.uniform(keys[2], (B, S), jnp.float32, 0.1, 1.0)
    num_dups = jax.random.randint(keys[3], (B, S), 1, 4).astype(jnp.float32)

    def linear_init(k, fan_in, fan_out):
        bound = 1.0 / math.sqrt(fan_in)
        kw, kb = jax.random.split(k)
        w = jax.random.uniform(kw, (fan_in, fan_out), jnp.float32, -bound, bound)
        b = jax.random.uniform(kb, (1, fan_out), jnp.float32, -bound, bound)
        return w, b

    wq, bq = linear_init(keys[4], H, H)
    wk, bk = linear_init(keys[5], H, H)
    wv, bv = linear_init(keys[6], H, H)
    wd, bd = linear_init(keys[7], H, H)
    params = {
        "ln_g": 1.0 + 0.1 * jax.random.normal(keys[8], (1, H), jnp.float32),
        "ln_b": 0.1 * jax.random.normal(keys[9], (1, H), jnp.float32),
        "wq": wq, "bq": bq, "wk": wk, "bk": bk,
        "wv": wv, "bv": bv, "wd": wd, "bd": bd,
    }

    out = weighted_attention(hidden_states, attention_mask, state_scores,
                             num_dups, params, num_heads=NUM_HEADS,
                             eps=1e-12, scale_correction=True)
    out = jax.block_until_ready(out)

    ref = reference_weighted_attention(hidden_states, attention_mask, state_scores,
                                       num_dups, params, num_heads=NUM_HEADS,
                                       eps=1e-12, scale_correction=True)
    assert out.shape == (B, S, H)
    assert out.dtype == hidden_states.dtype
    # bf16 MXU operands + approx reciprocal vs. an all-f32 reference.
    assert jnp.allclose(out, ref, atol=5e-2, rtol=5e-2)

    print("KERNEL_OK")
</pallas_src>

<mosaic_0001>
module attributes {stable_mosaic.version = 11 : i64} {
  func.func @weighted_attention_kernel(%arg0: i32, %arg1: i32, %arg2: memref<1x128x256xf32, #tpu.memory_space<vmem>>, %arg3: memref<1x1x128xf32, #tpu.memory_space<vmem>>, %arg4: memref<1x256xf32, #tpu.memory_space<vmem>>, %arg5: memref<1x256xf32, #tpu.memory_space<vmem>>, %arg6: memref<2x256x384xbf16, #tpu.memory_space<vmem>>, %arg7: memref<2x1x384xf32, #tpu.memory_space<vmem>>, %arg8: memref<2x128x256xbf16, #tpu.memory_space<vmem>>, %arg9: memref<1x256xf32, #tpu.memory_space<vmem>>, %arg10: memref<1x128x256xf32, #tpu.memory_space<vmem>>, %arg11: memref<128x256xbf16, #tpu.memory_space<vmem>>, %arg12: memref<2x128x128xbf16, #tpu.memory_space<vmem>>) attributes {dimension_semantics = [#tpu.dimension_semantics<parallel>, #tpu.dimension_semantics<arbitrary>], iteration_bounds = array<i64: 2, 2>, scalar_prefetch = 0 : i64, scratch_operands = 2 : i64, tpu.core_type = #tpu.core_type<tc>, window_params = [{transform_indices = @transform_0, window_bounds = array<i64: 1, 128, 256>}, {transform_indices = @transform_1, window_bounds = array<i64: 1, 1, 128>}, {pipeline_mode = #tpu.pipeline_mode<synchronous>, transform_indices = @transform_2, window_bounds = array<i64: 1, 256>}, {pipeline_mode = #tpu.pipeline_mode<synchronous>, transform_indices = @transform_3, window_bounds = array<i64: 1, 256>}, {pipeline_mode = #tpu.pipeline_mode<synchronous>, transform_indices = @transform_4, window_bounds = array<i64: 2, 256, 384>}, {pipeline_mode = #tpu.pipeline_mode<synchronous>, transform_indices = @transform_5, window_bounds = array<i64: 2, 1, 384>}, {pipeline_mode = #tpu.pipeline_mode<synchronous>, transform_indices = @transform_6, window_bounds = array<i64: 2, 128, 256>}, {pipeline_mode = #tpu.pipeline_mode<synchronous>, transform_indices = @transform_7, window_bounds = array<i64: 1, 256>}, {transform_indices = @transform_8, window_bounds = array<i64: 1, 128, 256>}]} {
    %c0_i32 = arith.constant 0 : i32
    %0 = arith.cmpi eq, %arg1, %c0_i32 : i32
    %1 = arith.extui %0 : i1 to i32
    %c0_i32_0 = arith.constant 0 : i32
    %2 = arith.cmpi ne, %1, %c0_i32_0 : i32
    scf.if %2 {
      %c0_20 = arith.constant 0 : index
      %c0_21 = arith.constant 0 : index
      %c0_22 = arith.constant 0 : index
      %67 = vector.load %arg2[%c0_20, %c0_21, %c0_22] : memref<1x128x256xf32, #tpu.memory_space<vmem>>, vector<1x128x256xf32>
      %68 = vector.shape_cast %67 : vector<1x128x256xf32> to vector<128x256xf32>
      %cst_23 = arith.constant dense<0.000000e+00> : vector<128xf32>
      %69 = vector.multi_reduction <add>, %68, %cst_23 [1] : vector<128x256xf32> to vector<128xf32>
      %70 = vector.shape_cast %69 : vector<128xf32> to vector<128x1xf32>
      %cst_24 = arith.constant 2.560000e+02 : f32
      %71 = vector.broadcast %cst_24 : f32 to vector<128x1xf32>
      %72 = arith.divf %70, %71 : vector<128x1xf32>
      %73 = vector.broadcast %72 : vector<128x1xf32> to vector<128x256xf32>
      %74 = arith.subf %68, %73 : vector<128x256xf32>
      %75 = arith.mulf %74, %74 : vector<128x256xf32>
      %cst_25 = arith.constant dense<0.000000e+00> : vector<128xf32>
      %76 = vector.multi_reduction <add>, %75, %cst_25 [1] : vector<128x256xf32> to vector<128xf32>
      %77 = vector.shape_cast %76 : vector<128xf32> to vector<128x1xf32>
      %cst_26 = arith.constant 2.560000e+02 : f32
      %78 = vector.broadcast %cst_26 : f32 to vector<128x1xf32>
      %79 = arith.divf %77, %78 : vector<128x1xf32>
      %80 = vector.broadcast %72 : vector<128x1xf32> to vector<128x256xf32>
      %81 = arith.subf %68, %80 : vector<128x256xf32>
      %cst_27 = arith.constant 9.99999996E-13 : f32
      %82 = vector.broadcast %cst_27 : f32 to vector<128x1xf32>
      %83 = arith.addf %79, %82 : vector<128x1xf32>
      %84 = math.rsqrt %83 : vector<128x1xf32>
      %85 = vector.broadcast %84 : vector<128x1xf32> to vector<128x256xf32>
      %86 = arith.mulf %81, %85 : vector<128x256xf32>
      %c0_28 = arith.constant 0 : index
      %c0_29 = arith.constant 0 : index
      %87 = vector.load %arg4[%c0_28, %c0_29] : memref<1x256xf32, #tpu.memory_space<vmem>>, vector<1x256xf32>
      %88 = vector.broadcast %87 : vector<1x256xf32> to vector<128x256xf32>
      %89 = arith.mulf %86, %88 : vector<128x256xf32>
      %c0_30 = arith.constant 0 : index
      %c0_31 = arith.constant 0 : index
      %90 = vector.load %arg5[%c0_30, %c0_31] : memref<1x256xf32, #tpu.memory_space<vmem>>, vector<1x256xf32>
      %91 = vector.broadcast %90 : vector<1x256xf32> to vector<128x256xf32>
      %92 = arith.addf %89, %91 : vector<128x256xf32>
      %93 = arith.truncf %92 : vector<128x256xf32> to vector<128x256xbf16>
      %c0_32 = arith.constant 0 : index
      %c0_33 = arith.constant 0 : index
      %94 = vector.load %arg11[%c0_32, %c0_33] : memref<128x256xbf16, #tpu.memory_space<vmem>>, vector<128x256xbf16>
      tpu.vector_store %arg11[%c0_32, %c0_33], %93 {strides = array<i32>} : memref<128x256xbf16, #tpu.memory_space<vmem>>, vector<128x256xbf16>,
    } else {
    }
    %c0 = arith.constant 0 : index
    %c0_1 = arith.constant 0 : index
    %3 = vector.load %arg11[%c0, %c0_1] : memref<128x256xbf16, #tpu.memory_space<vmem>>, vector<128x256xbf16>
    %4 = arith.index_cast %arg1 : i32 to index
    %c0_2 = arith.constant 0 : index
    %c0_3 = arith.constant 0 : index
    %5 = vector.load %arg6[%4, %c0_2, %c0_3] : memref<2x256x384xbf16, #tpu.memory_space<vmem>>, vector<1x256x384xbf16>
    %6 = vector.shape_cast %5 : vector<1x256x384xbf16> to vector<256x384xbf16>
    %cst = arith.constant dense<0.000000e+00> : vector<128x384xf32>
    %7 = tpu.matmul %3, %6, %cst {dimension_numbers = #tpu.dot_dimension_numbers<[1], [0], [0], [1], [0, 0, 1, 1], [], []>} : vector<128x256xbf16>, vector<256x384xbf16>, vector<128x384xf32> -> vector<128x384xf32>
    %8 = arith.index_cast %arg1 : i32 to index
    %c0_4 = arith.constant 0 : index
    %c0_5 = arith.constant 0 : index
    %9 = vector.load %arg7[%8, %c0_4, %c0_5] : memref<2x1x384xf32, #tpu.memory_space<vmem>>, vector<1x1x384xf32>
    %10 = vector.shape_cast %9 : vector<1x1x384xf32> to vector<1x384xf32>
    %11 = vector.broadcast %10 : vector<1x384xf32> to vector<128x384xf32>
    %12 = arith.addf %7, %11 : vector<128x384xf32>
    %13 = vector.extract_strided_slice %12 {offsets = [0, 0], sizes = [128, 128], strides = [1, 1]} : vector<128x384xf32> to vector<128x128xf32>
    %14 = arith.truncf %13 : vector<128x128xf32> to vector<128x128xbf16>
    %15 = vector.extract_strided_slice %12 {offsets = [0, 128], sizes = [128, 128], strides = [1, 1]} : vector<128x384xf32> to vector<128x128xf32>
    %16 = arith.truncf %15 : vector<128x128xf32> to vector<128x128xbf16>
    %17 = vector.extract_strided_slice %12 {offsets = [0, 256], sizes = [128, 128], strides = [1, 1]} : vector<128x384xf32> to vector<128x128xf32>
    %18 = arith.truncf %17 : vector<128x128xf32> to vector<128x128xbf16>
    %c0_6 = arith.constant 0 : index
    %c0_7 = arith.constant 0 : index
    %c0_8 = arith.constant 0 : index
    %19 = vector.load %arg3[%c0_6, %c0_7, %c0_8] : memref<1x1x128xf32, #tpu.memory_space<vmem>>, vector<1x1x128xf32>
    %20 = vector.shape_cast %19 : vector<1x1x128xf32> to vector<1x128xf32>
    %21 = vector.extract_strided_slice %14 {offsets = [0, 0], sizes = [128, 64], strides = [1, 1]} : vector<128x128xbf16> to vector<128x64xbf16>
    %22 = vector.extract_strided_slice %16 {offsets = [0, 0], sizes = [128, 64], strides = [1, 1]} : vector<128x128xbf16> to vector<128x64xbf16>
    %23 = vector.extract_strided_slice %18 {offsets = [0, 0], sizes = [128, 64], strides = [1, 1]} : vector<128x128xbf16> to vector<128x64xbf16>
    %cst_9 = arith.constant dense<0.000000e+00> : vector<128x128xf32>
    %24 = tpu.matmul %21, %22, %cst_9 {dimension_numbers = #tpu.dot_dimension_numbers<[1], [1], [0], [0], [0, 0, 1, 0], [], []>} : vector<128x64xbf16>, vector<128x64xbf16>, vector<128x128xf32> -> vector<128x128xf32>
    %25 = vector.broadcast %20 : vector<1x128xf32> to vector<128x128xf32>
    %26 = arith.addf %24, %25 : vector<128x128xf32>
    %cst_10 = arith.constant dense<0xFF800000> : vector<128xf32>
    %27 = vector.multi_reduction <maximumf>, %26, %cst_10 [1] : vector<128x128xf32> to vector<128xf32>
    %28 = vector.shape_cast %27 : vector<128xf32> to vector<128x1xf32>
    %29 = vector.broadcast %28 : vector<128x1xf32> to vector<128x128xf32>
    %30 = arith.subf %26, %29 : vector<128x128xf32>
    %31 = math.exp %30 : vector<128x128xf32>
    %cst_11 = arith.constant dense<0.000000e+00> : vector<128xf32>
    %32 = vector.multi_reduction <add>, %31, %cst_11 [1] : vector<128x128xf32> to vector<128xf32>
    %33 = vector.shape_cast %32 : vector<128xf32> to vector<128x1xf32>
    %34 = arith.truncf %31 : vector<128x128xf32> to vector<128x128xbf16>
    %cst_12 = arith.constant dense<0.000000e+00> : vector<128x64xf32>
    %35 = tpu.matmul %34, %23, %cst_12 {dimension_numbers = #tpu.dot_dimension_numbers<[1], [0], [0], [1], [0, 0, 1, 1], [], []>} : vector<128x128xbf16>, vector<128x64xbf16>, vector<128x64xf32> -> vector<128x64xf32>
    %36 = tpu.reciprocal %33 {approx = true} : vector<128x1xf32> -> vector<128x1xf32>
    %37 = vector.broadcast %36 : vector<128x1xf32> to vector<128x64xf32>
    %38 = arith.mulf %35, %37 : vector<128x64xf32>
    %39 = arith.truncf %38 : vector<128x64xf32> to vector<128x64xbf16>
    %40 = vector.extract_strided_slice %14 {offsets = [0, 64], sizes = [128, 64], strides = [1, 1]} : vector<128x128xbf16> to vector<128x64xbf16>
    %41 = vector.extract_strided_slice %16 {offsets = [0, 64], sizes = [128, 64], strides = [1, 1]} : vector<128x128xbf16> to vector<128x64xbf16>
    %42 = vector.extract_strided_slice %18 {offsets = [0, 64], sizes = [128, 64], strides = [1, 1]} : vector<128x128xbf16> to vector<128x64xbf16>
    %cst_13 = arith.constant dense<0.000000e+00> : vector<128x128xf32>
    %43 = tpu.matmul %40, %41, %cst_13 {dimension_numbers = #tpu.dot_dimension_numbers<[1], [1], [0], [0], [0, 0, 1, 0], [], []>} : vector<128x64xbf16>, vector<128x64xbf16>, vector<128x128xf32> -> vector<128x128xf32>
    %44 = vector.broadcast %20 : vector<1x128xf32> to vector<128x128xf32>
    %45 = arith.addf %43, %44 : vector<128x128xf32>
    %cst_14 = arith.constant dense<0xFF800000> : vector<128xf32>
    %46 = vector.multi_reduction <maximumf>, %45, %cst_14 [1] : vector<128x128xf32> to vector<128xf32>
    %47 = vector.shape_cast %46 : vector<128xf32> to vector<128x1xf32>
    %48 = vector.broadcast %47 : vector<128x1xf32> to vector<128x128xf32>
    %49 = arith.subf %45, %48 : vector<128x128xf32>
    %50 = math.exp %49 : vector<128x128xf32>
    %cst_15 = arith.constant dense<0.000000e+00> : vector<128xf32>
    %51 = vector.multi_reduction <add>, %50, %cst_15 [1] : vector<128x128xf32> to vector<128xf32>
    %52 = vector.shape_cast %51 : vector<128xf32> to vector<128x1xf32>
    %53 = arith.truncf %50 : vector<128x128xf32> to vector<128x128xbf16>
    %cst_16 = arith.constant dense<0.000000e+00> : vector<128x64xf32>
    %54 = tpu.matmul %53, %42, %cst_16 {dimension_numbers = #tpu.dot_dimension_numbers<[1], [0], [0], [1], [0, 0, 1, 1], [], []>} : vector<128x128xbf16>, vector<128x64xbf16>, vector<128x64xf32> -> vector<128x64xf32>
    %55 = tpu.reciprocal %52 {approx = true} : vector<128x1xf32> -> vector<128x1xf32>
    %56 = vector.broadcast %55 : vector<128x1xf32> to vector<128x64xf32>
    %57 = arith.mulf %54, %56 : vector<128x64xf32>
    %58 = arith.truncf %57 : vector<128x64xf32> to vector<128x64xbf16>
    %59 = tpu.concatenate %39, %58 in 1 : vector<128x64xbf16>, vector<128x64xbf16> -> vector<128x128xbf16>
    %60 = arith.index_cast %arg1 : i32 to index
    %c0_17 = arith.constant 0 : index
    %c0_18 = arith.constant 0 : index
    %61 = vector.load %arg12[%60, %c0_17, %c0_18] : memref<2x128x128xbf16, #tpu.memory_space<vmem>>, vector<1x128x128xbf16>
    %62 = vector.shape_cast %61 : vector<1x128x128xbf16> to vector<128x128xbf16>
    %63 = vector.shape_cast %59 : vector<128x128xbf16> to vector<1x128x128xbf16>
    tpu.vector_store %arg12[%60, %c0_17, %c0_18], %63 {strides = array<i32>} : memref<2x128x128xbf16, #tpu.memory_space<vmem>>, vector<1x128x128xbf16>,
    %c1_i32 = arith.constant 1 : i32
    %64 = arith.cmpi eq, %arg1, %c1_i32 : i32
    %65 = arith.extui %64 : i1 to i32
    %c0_i32_19 = arith.constant 0 : i32
    %66 = arith.cmpi ne, %65, %c0_i32_19 : i32
    scf.if %66 {
      %c0_20 = arith.constant 0 : index
      %c0_21 = arith.constant 0 : index
      %c0_22 = arith.constant 0 : index
      %67 = vector.load %arg12[%c0_20, %c0_21, %c0_22] : memref<2x128x128xbf16, #tpu.memory_space<vmem>>, vector<1x128x128xbf16>
      %68 = vector.shape_cast %67 : vector<1x128x128xbf16> to vector<128x128xbf16>
      %c0_23 = arith.constant 0 : index
      %c0_24 = arith.constant 0 : index
      %c0_25 = arith.constant 0 : index
      %69 = vector.load %arg8[%c0_23, %c0_24, %c0_25] : memref<2x128x256xbf16, #tpu.memory_space<vmem>>, vector<1x128x256xbf16>
      %70 = vector.shape_cast %69 : vector<1x128x256xbf16> to vector<128x256xbf16>
      %cst_26 = arith.constant dense<0.000000e+00> : vector<128x256xf32>
      %71 = tpu.matmul %68, %70, %cst_26 {dimension_numbers = #tpu.dot_dimension_numbers<[1], [0], [0], [1], [0, 0, 1, 1], [], []>} : vector<128x128xbf16>, vector<128x256xbf16>, vector<128x256xf32> -> vector<128x256xf32>
      %c1 = arith.constant 1 : index
      %c0_27 = arith.constant 0 : index
      %c0_28 = arith.constant 0 : index
      %72 = vector.load %arg12[%c1, %c0_27, %c0_28] : memref<2x128x128xbf16, #tpu.memory_space<vmem>>, vector<1x128x128xbf16>
      %73 = vector.shape_cast %72 : vector<1x128x128xbf16> to vector<128x128xbf16>
      %c1_29 = arith.constant 1 : index
      %c0_30 = arith.constant 0 : index
      %c0_31 = arith.constant 0 : index
      %74 = vector.load %arg8[%c1_29, %c0_30, %c0_31] : memref<2x128x256xbf16, #tpu.memory_space<vmem>>, vector<1x128x256xbf16>
      %75 = vector.shape_cast %74 : vector<1x128x256xbf16> to vector<128x256xbf16>
      %cst_32 = arith.constant dense<0.000000e+00> : vector<128x256xf32>
      %76 = tpu.matmul %73, %75, %cst_32 {dimension_numbers = #tpu.dot_dimension_numbers<[1], [0], [0], [1], [0, 0, 1, 1], [], []>} : vector<128x128xbf16>, vector<128x256xbf16>, vector<128x256xf32> -> vector<128x256xf32>
      %77 = arith.addf %71, %76 : vector<128x256xf32>
      %c0_33 = arith.constant 0 : index
      %c0_34 = arith.constant 0 : index
      %78 = vector.load %arg9[%c0_33, %c0_34] : memref<1x256xf32, #tpu.memory_space<vmem>>, vector<1x256xf32>
      %79 = vector.broadcast %78 : vector<1x256xf32> to vector<128x256xf32>
      %80 = arith.addf %77, %79 : vector<128x256xf32>
      %c0_35 = arith.constant 0 : index
      %c0_36 = arith.constant 0 : index
      %c0_37 = arith.constant 0 : index
      %81 = vector.load %arg10[%c0_35, %c0_36, %c0_37] : memref<1x128x256xf32, #tpu.memory_space<vmem>>, vector<1x128x256xf32>
      %82 = vector.shape_cast %81 : vector<1x128x256xf32> to vector<128x256xf32>
      %83 = vector.shape_cast %80 : vector<128x256xf32> to vector<1x128x256xf32>
      tpu.vector_store %arg10[%c0_35, %c0_36, %c0_37], %83 {strides = array<i32>} : memref<1x128x256xf32, #tpu.memory_space<vmem>>, vector<1x128x256xf32>,
    } else {
    }
    return
  }
  func.func @transform_0(%arg0: i32, %arg1: i32) -> (i32, i32, i32) {
    %c0_i32 = arith.constant 0 : i32
    %c0_i32_0 = arith.constant 0 : i32
    %c0_i32_1 = arith.constant 0 : i32
    return %arg0, %c0_i32, %c0_i32_0 : i32, i32, i32
  }
  func.func @transform_1(%arg0: i32, %arg1: i32) -> (i32, i32, i32) {
    %c0_i32 = arith.constant 0 : i32
    %c0_i32_0 = arith.constant 0 : i32
    %c0_i32_1 = arith.constant 0 : i32
    return %arg0, %c0_i32, %c0_i32_0 : i32, i32, i32
  }
  func.func @transform_2(%arg0: i32, %arg1: i32) -> (i32, i32) {
    %c0_i32 = arith.constant 0 : i32
    %c0_i32_0 = arith.constant 0 : i32
    %c0_i32_1 = arith.constant 0 : i32
    return %c0_i32, %c0_i32_0 : i32, i32
  }
  func.func @transform_3(%arg0: i32, %arg1: i32) -> (i32, i32) {
    %c0_i32 = arith.constant 0 : i32
    %c0_i32_0 = arith.constant 0 : i32
    %c0_i32_1 = arith.constant 0 : i32
    return %c0_i32, %c0_i32_0 : i32, i32
  }
  func.func @transform_4(%arg0: i32, %arg1: i32) -> (i32, i32, i32) {
    %c0_i32 = arith.constant 0 : i32
    %c0_i32_0 = arith.constant 0 : i32
    %c0_i32_1 = arith.constant 0 : i32
    %c0_i32_2 = arith.constant 0 : i32
    return %c0_i32, %c0_i32_0, %c0_i32_1 : i32, i32, i32
  }
  func.func @transform_5(%arg0: i32, %arg1: i32) -> (i32, i32, i32) {
    %c0_i32 = arith.constant 0 : i32
    %c0_i32_0 = arith.constant 0 : i32
    %c0_i32_1 = arith.constant 0 : i32
    %c0_i32_2 = arith.constant 0 : i32
    return %c0_i32, %c0_i32_0, %c0_i32_1 : i32, i32, i32
  }
  func.func @transform_6(%arg0: i32, %arg1: i32) -> (i32, i32, i32) {
    %c0_i32 = arith.constant 0 : i32
    %c0_i32_0 = arith.constant 0 : i32
    %c0_i32_1 = arith.constant 0 : i32
    %c0_i32_2 = arith.constant 0 : i32
    return %c0_i32, %c0_i32_0, %c0_i32_1 : i32, i32, i32
  }
  func.func @transform_7(%arg0: i32, %arg1: i32) -> (i32, i32) {
    %c0_i32 = arith.constant 0 : i32
    %c0_i32_0 = arith.constant 0 : i32
    %c0_i32_1 = arith.constant 0 : i32
    return %c0_i32, %c0_i32_0 : i32, i32
  }
  func.func @transform_8(%arg0: i32, %arg1: i32) -> (i32, i32, i32) {
    %c0_i32 = arith.constant 0 : i32
    %c0_i32_0 = arith.constant 0 : i32
    %c0_i32_1 = arith.constant 0 : i32
    return %arg0, %c0_i32, %c0_i32_0 : i32, i32, i32
  }
}

</mosaic_0001>

<llo_original>
// kernel: tpu_custom_call.1
$region0: #{tpu_custom_call.1}
  #allocation0 [shape = 'u32[]', space=smem, size = 0x4, offset = 0x4, fixed_abs, tag = 'smem constant byte address 0x4 - core index']
  #allocation1 [shape = 'u32[144,128]{1,0:T(1,128)}', space=vmem, size = 0x12000, scoped, tag = 'internal scratch']
  #allocation2 [shape = 'bf16[128,256]{1,0:T(16,128)(2,1)}', space=vmem, size = 0x10000, scoped, tag = 'scratch operand']
  #allocation3 [shape = 'bf16[2,128,128]{2,1,0:T(16,128)(2,1)}', space=vmem, size = 0x10000, scoped, tag = 'scratch operand']
  %s0 = inlined_call_operand.hbm [shape: f32[2,128,256], index: 0, kind: input, shape index: {}]
  %s1 = inlined_call_operand.vmem [shape: f32[2,1,128], index: 1, kind: input, shape index: {}]
  %s2 = inlined_call_operand.vmem [shape: f32[1,256], index: 2, kind: input, shape index: {}]
  %s3 = inlined_call_operand.hbm [shape: f32[1,256], index: 3, kind: input, shape index: {}]
  %s4 = inlined_call_operand.hbm [shape: bf16[2,256,384], index: 4, kind: input, shape index: {}]
  %s5 = inlined_call_operand.vmem [shape: f32[2,1,384], index: 5, kind: input, shape index: {}]
  %s6 = inlined_call_operand.hbm [shape: bf16[2,128,256], index: 6, kind: input, shape index: {}]
  %s7 = inlined_call_operand.vmem [shape: f32[1,256], index: 7, kind: input, shape index: {}]
  %s8 = inlined_call_operand.hbm [shape: f32[2,128,256], index: 8, kind: output, shape index: {}]
  %s9 = sld [smem:[#allocation0]]
  $region89: #{tpu_custom_call.1} parent=0
    _
  %s11 = ssub.s32 1, %s9
  %s12 = scalar_select 0, %s11, %s9
  $region1: #{tpu_custom_call.1} parent=0
    #allocation4 [shape = 'u8[262144]{0}', space=vmem, size = 0x40000, scoped, tag = 'input window, operand 0']
    #allocation5 [shape = 's32[2]{0}', space=sflag, size = 0x8, scoped, tag = 'scoped memory for tpu_custom_call.1']
    #allocation6 [shape = 's32[2]{0}', space=sflag, size = 0x8, scoped, tag = 'scoped memory for tpu_custom_call.1']
    #allocation7 [shape = 'u8[1024]{0}', space=vmem, size = 0x400, scoped, tag = 'input window, operand 3, single buffered']
    #allocation8 [shape = 's32[1]{0}', space=sflag, size = 0x4, scoped, tag = 'scoped memory for tpu_custom_call.1']
    #allocation9 [shape = 'u8[393216]{0}', space=vmem, size = 0x60000, scoped, tag = 'input window, operand 4, single buffered']
    #allocation10 [shape = 'u8[131072]{0}', space=vmem, size = 0x20000, scoped, tag = 'input window, operand 6, single buffered']
    #allocation11 [shape = 's32[1]{0}', space=sflag, size = 0x4, scoped, tag = 'scoped memory for tpu_custom_call.1']
    #allocation12 [shape = 'u8[262144]{0}', space=vmem, size = 0x40000, scoped, tag = 'output window, operand 0']
    %13 = vsyncpa [#allocation5], 0
    %s14 = scalar_lea.sflag [#allocation5], 1
    %15 = vsyncpa %s14, 0
    %16 = vsyncpa [#allocation8], 0
    %17 = vsyncpa [#allocation11], 0
    %18 = vsyncpa [#allocation6], 0
    %s19 = scalar_lea.sflag [#allocation6], 1
    %20 = vsyncpa %s19, 0
    loop: start=0, step=1, limit=6
    $region2: #{tpu_custom_call.1} parent=1 // loop_pre_header
      _
    $region3: #{tpu_custom_call.1} parent=1 // loop_header
      %s22 = sphi 0, %s26
      %p23 = scmp.ge.s32.totalorder %s22, 6
      %s29 = sphi 0, %s41
      %s30 = sphi 0, %s37
      %s31 = sphi 0, %s29
      %s32 = sphi 0, %s30
      %s33 = sphi 0, %s31
      %s34 = sphi 0, %s32
      %s44 = sphi 0, %s46
      %s47 = sphi 0, %s44
      %s48 = sphi 0, %s47
      %s64 = sphi 0, %s48
      %s70 = sphi 0, %s72
      %s73 = sphi 0, %s70
      %s74 = sphi 0, %s73
      %s90 = sphi 0, %s74
      %s94 = sphi 0, %s94
      %s96 = sphi 0, %s94
      %s97 = sphi 0, %s96
      %s111 = sphi 0, %s97
      %s115 = sphi 0, %s115
      %s117 = sphi 0, %s115
      %s118 = sphi 0, %s117
      %s132 = sphi 0, %s118
      %s136 = sphi 0, %s136
      %s138 = sphi 0, %s136
      %s139 = sphi 0, %s138
      %s153 = sphi 0, %s139
      %s157 = sphi 0, %s157
      %s159 = sphi 0, %s157
      %s160 = sphi 0, %s159
      %s174 = sphi 0, %s160
      %s178 = sphi 0, %s178
      %s180 = sphi 0, %s178
      %s181 = sphi 0, %s180
      %s195 = sphi 0, %s181
      %s199 = sphi 0, %s199
      %s201 = sphi 0, %s199
      %s202 = sphi 0, %s201
      %s216 = sphi 0, %s202
      %s222 = sphi 0, %s224
      %s225 = sphi 0, %s222
      %s226 = sphi 0, %s225
      %s242 = sphi 0, %s226
    $region4: #{tpu_custom_call.1} parent=1 // loop_header_branch
      %25 = sbr.rel (%p23) target = $region8
    $region5: #{tpu_custom_call.1} parent=1 // loop_body
      %s27 = ssub.s32 %s22, 1
      %s28 = ssub.s32 %s22, 2
      %s35 = sadd.s32 1, %s30
      %p36 = scmp.ge.s32.totalorder %s35, 2
      %s37 = scalar_select %p36, 0, %s35
      %s38 = sadd.s32 1, %s29
      %s39 = scalar_select %p36, %s38, %s29
      %p40 = scmp.ge.s32.totalorder %s39, 2
      %s41 = scalar_select %p40, 0, %s39
      %s42 = ssub.s32 %s29, %s41
      %p43 = scmp.eq.s32.totalorder %s42, 0
      %s45 = sadd.s32 %s44, 1
      %s46 = scalar_select %p43, %s44, %s45
      %p49 = pneg %p43
      %p50 = scmp.eq.s32.totalorder %s22, 3
      %p51 = por %p49, %p50
      %p52 = scmp.ne.s32.totalorder %s44, %s47
      %p53 = scmp.eq.s32.totalorder %s22, 0
      %p54 = por %p52, %p53
      %p55 = scmp.ne.s32.totalorder %s44, %s47
      %p56 = scmp.eq.s32.totalorder %s27, 3
      %p57 = por %p55, %p56
      %p58 = scmp.ne.s32.totalorder %s47, %s48
      %p59 = scmp.eq.s32.totalorder %s27, 0
      %p60 = por %p58, %p59
      %p61 = scmp.ne.s32.totalorder %s47, %s48
      %p62 = scmp.eq.s32.totalorder %s28, 3
      %p63 = por %p61, %p62
      %p65 = scmp.ne.s32.totalorder %s48, %s64
      %p66 = scmp.eq.s32.totalorder %s28, 0
      %p67 = por %p65, %p66
      %s68 = ssub.s32 %s29, %s41
      %p69 = scmp.eq.s32.totalorder %s68, 0
      %s71 = sadd.s32 %s70, 1
      %s72 = scalar_select %p69, %s70, %s71
      %p75 = pneg %p69
      %p76 = scmp.eq.s32.totalorder %s22, 3
      %p77 = por %p75, %p76
      %p78 = scmp.ne.s32.totalorder %s70, %s73
      %p79 = scmp.eq.s32.totalorder %s22, 0
      %p80 = por %p78, %p79
      %p81 = scmp.ne.s32.totalorder %s70, %s73
      %p82 = scmp.eq.s32.totalorder %s27, 3
      %p83 = por %p81, %p82
      %p84 = scmp.ne.s32.totalorder %s73, %s74
      %p85 = scmp.eq.s32.totalorder %s27, 0
      %p86 = por %p84, %p85
      %p87 = scmp.ne.s32.totalorder %s73, %s74
      %p88 = scmp.eq.s32.totalorder %s28, 3
      %p89 = por %p87, %p88
      %p91 = scmp.ne.s32.totalorder %s74, %s90
      %p92 = scmp.eq.s32.totalorder %s28, 0
      %p93 = por %p91, %p92
      %s95 = sadd.s32 %s94, 1
      %p98 = scmp.eq.s32.totalorder %s22, 3
      %p99 = scmp.ne.s32.totalorder %s94, %s96
      %p100 = scmp.eq.s32.totalorder %s22, 0
      %p101 = por %p99, %p100
      %p102 = scmp.ne.s32.totalorder %s94, %s96
      %p103 = scmp.eq.s32.totalorder %s27, 3
      %p104 = por %p102, %p103
      %p105 = scmp.ne.s32.totalorder %s96, %s97
      %p106 = scmp.eq.s32.totalorder %s27, 0
      %p107 = por %p105, %p106
      %p108 = scmp.ne.s32.totalorder %s96, %s97
      %p109 = scmp.eq.s32.totalorder %s28, 3
      %p110 = por %p108, %p109
      %p112 = scmp.ne.s32.totalorder %s97, %s111
      %p113 = scmp.eq.s32.totalorder %s28, 0
      %p114 = por %p112, %p113
      %s116 = sadd.s32 %s115, 1
      %p119 = scmp.eq.s32.totalorder %s22, 3
      %p120 = scmp.ne.s32.totalorder %s115, %s117
      %p121 = scmp.eq.s32.totalorder %s22, 0
      %p122 = por %p120, %p121
      %p123 = scmp.ne.s32.totalorder %s115, %s117
      %p124 = scmp.eq.s32.totalorder %s27, 3
      %p125 = por %p123, %p124
      %p126 = scmp.ne.s32.totalorder %s117, %s118
      %p127 = scmp.eq.s32.totalorder %s27, 0
      %p128 = por %p126, %p127
      %p129 = scmp.ne.s32.totalorder %s117, %s118
      %p130 = scmp.eq.s32.totalorder %s28, 3
      %p131 = por %p129, %p130
      %p133 = scmp.ne.s32.totalorder %s118, %s132
      %p134 = scmp.eq.s32.totalorder %s28, 0
      %p135 = por %p133, %p134
      %s137 = sadd.s32 %s136, 1
      %p140 = scmp.eq.s32.totalorder %s22, 3
      %p141 = scmp.ne.s32.totalorder %s136, %s138
      %p142 = scmp.eq.s32.totalorder %s22, 0
      %p143 = por %p141, %p142
      %p144 = scmp.ne.s32.totalorder %s136, %s138
      %p145 = scmp.eq.s32.totalorder %s27, 3
      %p146 = por %p144, %p145
      %p147 = scmp.ne.s32.totalorder %s138, %s139
      %p148 = scmp.eq.s32.totalorder %s27, 0
      %p149 = por %p147, %p148
      %p150 = scmp.ne.s32.totalorder %s138, %s139
      %p151 = scmp.eq.s32.totalorder %s28, 3
      %p152 = por %p150, %p151
      %p154 = scmp.ne.s32.totalorder %s139, %s153
      %p155 = scmp.eq.s32.totalorder %s28, 0
      %p156 = por %p154, %p155
      %s158 = sadd.s32 %s157, 1
      %p161 = scmp.eq.s32.totalorder %s22, 3
      %p162 = scmp.ne.s32.totalorder %s157, %s159
      %p163 = scmp.eq.s32.totalorder %s22, 0
      %p164 = por %p162, %p163
      %p165 = scmp.ne.s32.totalorder %s157, %s159
      %p166 = scmp.eq.s32.totalorder %s27, 3
      %p167 = por %p165, %p166
      %p168 = scmp.ne.s32.totalorder %s159, %s160
      %p169 = scmp.eq.s32.totalorder %s27, 0
      %p170 = por %p168, %p169
      %p171 = scmp.ne.s32.totalorder %s159, %s160
      %p172 = scmp.eq.s32.totalorder %s28, 3
      %p173 = por %p171, %p172
      %p175 = scmp.ne.s32.totalorder %s160, %s174
      %p176 = scmp.eq.s32.totalorder %s28, 0
      %p177 = por %p175, %p176
      %s179 = sadd.s32 %s178, 1
      %p182 = scmp.eq.s32.totalorder %s22, 3
      %p183 = scmp.ne.s32.totalorder %s178, %s180
      %p184 = scmp.eq.s32.totalorder %s22, 0
      %p185 = por %p183, %p184
      %p186 = scmp.ne.s32.totalorder %s178, %s180
      %p187 = scmp.eq.s32.totalorder %s27, 3
      %p188 = por %p186, %p187
      %p189 = scmp.ne.s32.totalorder %s180, %s181
      %p190 = scmp.eq.s32.totalorder %s27, 0
      %p191 = por %p189, %p190
      %p192 = scmp.ne.s32.totalorder %s180, %s181
      %p193 = scmp.eq.s32.totalorder %s28, 3
      %p194 = por %p192, %p193
      %p196 = scmp.ne.s32.totalorder %s181, %s195
      %p197 = scmp.eq.s32.totalorder %s28, 0
      %p198 = por %p196, %p197
      %s200 = sadd.s32 %s199, 1
      %p203 = scmp.eq.s32.totalorder %s22, 3
      %p204 = scmp.ne.s32.totalorder %s199, %s201
      %p205 = scmp.eq.s32.totalorder %s22, 0
      %p206 = por %p204, %p205
      %p207 = scmp.ne.s32.totalorder %s199, %s201
      %p208 = scmp.eq.s32.totalorder %s27, 3
      %p209 = por %p207, %p208
      %p210 = scmp.ne.s32.totalorder %s201, %s202
      %p211 = scmp.eq.s32.totalorder %s27, 0
      %p212 = por %p210, %p211
      %p213 = scmp.ne.s32.totalorder %s201, %s202
      %p214 = scmp.eq.s32.totalorder %s28, 3
      %p215 = por %p213, %p214
      %p217 = scmp.ne.s32.totalorder %s202, %s216
      %p218 = scmp.eq.s32.totalorder %s28, 0
      %p219 = por %p217, %p218
      %s220 = ssub.s32 %s29, %s41
      %p221 = scmp.eq.s32.totalorder %s220, 0
      %s223 = sadd.s32 %s222, 1
      %s224 = scalar_select %p221, %s222, %s223
      %p227 = pneg %p221
      %p228 = scmp.eq.s32.totalorder %s22, 3
      %p229 = por %p227, %p228
      %p230 = scmp.ne.s32.totalorder %s222, %s225
      %p231 = scmp.eq.s32.totalorder %s22, 0
      %p232 = por %p230, %p231
      %p233 = scmp.ne.s32.totalorder %s222, %s225
      %p234 = scmp.eq.s32.totalorder %s27, 3
      %p235 = por %p233, %p234
      %p236 = scmp.ne.s32.totalorder %s225, %s226
      %p237 = scmp.eq.s32.totalorder %s27, 0
      %p238 = por %p236, %p237
      %p239 = scmp.ne.s32.totalorder %s225, %s226
      %p240 = scmp.eq.s32.totalorder %s28, 3
      %p241 = por %p239, %p240
      %p243 = scmp.ne.s32.totalorder %s226, %s242
      %p244 = scmp.eq.s32.totalorder %s28, 0
      %p245 = por %p243, %p244
      %p246 = scmp.le.s32.totalorder 1, %s22
      %p247 = scmp.lt.s32.totalorder %s22, 5
      %p248 = pnand %p246, %p247
      %p249 = pneg %p248
      // Predicated region
      $region9: #{tpu_custom_call.1} parent=5 // pred_check
        _
      $region10: #{tpu_custom_call.1} parent=5 // pred_check_branch
        %251 = sbr.rel (%p248) target = $region12
      $region11: #{tpu_custom_call.1} parent=5 // pred_region
        %s252 = ssub.s32 %s22, 1
        // Predicated region
        $region13: #{tpu_custom_call.1} parent=11 // pred_check
          %p253 = pneg %p107
        $region14: #{tpu_custom_call.1} parent=11 // pred_check_branch
          %255 = sbr.rel (%p253) target = $region16
        $region15: #{tpu_custom_call.1} parent=11 // pred_region
          _
        $region16: #{tpu_custom_call.1} parent=11 // pred_fallthru
          _
        // Predicated region
        $region17: #{tpu_custom_call.1} parent=11 // pred_check
          %p256 = pneg %p128
        $region18: #{tpu_custom_call.1} parent=11 // pred_check_branch
          %258 = sbr.rel (%p256) target = $region20
        $region19: #{tpu_custom_call.1} parent=11 // pred_region
          %s260 = ssub.s32 32, 32
          %261 = vsyncadd [#allocation8], %s260
          %s263 = sshll.u32 [#allocation7], 4
          %s264 = int_to_ptr.vmem [resolvable:$true] %s263
          %266 = dma.hbm_to_vmem [thread:$0]  %s3, 32, %s264, [#allocation8]
        $region20: #{tpu_custom_call.1} parent=11 // pred_fallthru
          _
        // Predicated region
        $region21: #{tpu_custom_call.1} parent=11 // pred_check
          %p267 = pneg %p149
        $region22: #{tpu_custom_call.1} parent=11 // pred_check_branch
          %269 = sbr.rel (%p267) target = $region24
        $region23: #{tpu_custom_call.1} parent=11 // pred_region
          %s271 = ssub.s32 12288, 12288
          %272 = vsyncadd [#allocation8], %s271
          %s273 = sshll.u32 [#allocation9], 4
          %s274 = int_to_ptr.vmem [resolvable:$true] %s273
          %279 = dma.hbm_to_vmem [thread:$0]  %s4, 12288, %s274, [#allocation8], 192, 192, 12
        $region24: #{tpu_custom_call.1} parent=11 // pred_fallthru
          _
        // Predicated region
        $region25: #{tpu_custom_call.1} parent=11 // pred_check
          %p280 = pneg %p170
        $region26: #{tpu_custom_call.1} parent=11 // pred_check_branch
          %282 = sbr.rel (%p280) target = $region28
        $region27: #{tpu_custom_call.1} parent=11 // pred_region
          _
        $region28: #{tpu_custom_call.1} parent=11 // pred_fallthru
          _
        // Predicated region
        $region29: #{tpu_custom_call.1} parent=11 // pred_check
          %p283 = pneg %p191
        $region30: #{tpu_custom_call.1} parent=11 // pred_check_branch
          %285 = sbr.rel (%p283) target = $region32
        $region31: #{tpu_custom_call.1} parent=11 // pred_region
          %s287 = ssub.s32 4096, 4096
          %288 = vsyncadd [#allocation11], %s287
          %s289 = sshll.u32 [#allocation10], 4
          %s290 = int_to_ptr.vmem [resolvable:$true] %s289
          %295 = dma.hbm_to_vmem [thread:$0]  %s6, 4096, %s290, [#allocation11], 128, 128, 8
        $region32: #{tpu_custom_call.1} parent=11 // pred_fallthru
          _
        // Predicated region
        $region33: #{tpu_custom_call.1} parent=11 // pred_check
          %p296 = pneg %p212
        $region34: #{tpu_custom_call.1} parent=11 // pred_check_branch
          %298 = sbr.rel (%p296) target = $region36
        $region35: #{tpu_custom_call.1} parent=11 // pred_region
          _
        $region36: #{tpu_custom_call.1} parent=11 // pred_fallthru
          _
      $region12: #{tpu_custom_call.1} parent=5 // pred_fallthru
        _
      %p299 = scmp.lt.s32.totalorder %s22, 4
      // Predicated region
      $region37: #{tpu_custom_call.1} parent=5 // pred_check
        %p300 = pneg %p299
      $region38: #{tpu_custom_call.1} parent=5 // pred_check_branch
        %302 = sbr.rel (%p300) target = $region40
      $region39: #{tpu_custom_call.1} parent=5 // pred_region
        // Predicated region
        $region41: #{tpu_custom_call.1} parent=39 // pred_check
          %p303 = pneg %p54
        $region42: #{tpu_custom_call.1} parent=39 // pred_check_branch
          %305 = sbr.rel (%p303) target = $region44
        $region43: #{tpu_custom_call.1} parent=39 // pred_region
          %s306 = sand.u32 %s44, 1
          %s307 = scalar_lea.sflag [#allocation5], %s306
          %s308 = sand.u32 %s44, 1
          %s309 = smul.addr %s308, 256
          %s310 = scalar_lea.vmem [#allocation4], %s309
          %s312 = ssub.s32 4096, 4096
          %313 = vsyncadd %s307, %s312
          %s314 = smul.addr %s29, 32
          %s315 = smul.addr %s314, 128
          %s316 = scalar_lea.hbm %s0, %s315
          %s317 = sshll.u32 %s310, 4
          %s318 = int_to_ptr.vmem [resolvable:$true] %s317
          %323 = dma.hbm_to_vmem [thread:$0]  %s316, 4096, %s318, %s307, 256, 256, 16
        $region44: #{tpu_custom_call.1} parent=39 // pred_fallthru
          _
        // Predicated region
        $region45: #{tpu_custom_call.1} parent=39 // pred_check
          %p324 = pneg %p80
        $region46: #{tpu_custom_call.1} parent=39 // pred_check_branch
          %326 = sbr.rel (%p324) target = $region48
        $region47: #{tpu_custom_call.1} parent=39 // pred_region
          %p327 = scmp.lt.s32.totalorder %s29, 1
          %s328 = scalar_select %p327, %s29, 1
          %s329 = scalar_lea.vmem %s1, %s328
        $region48: #{tpu_custom_call.1} parent=39 // pred_fallthru
          _
      $region40: #{tpu_custom_call.1} parent=5 // pred_fallthru
        _
      %p330 = scmp.le.s32.totalorder 1, %s22
      %p331 = scmp.lt.s32.totalorder %s22, 5
      %p332 = pnand %p330, %p331
      %p333 = pneg %p332
      // Predicated region
      $region49: #{tpu_custom_call.1} parent=5 // pred_check
        _
      $region50: #{tpu_custom_call.1} parent=5 // pred_check_branch
        %335 = sbr.rel (%p332) target = $region52
      $region51: #{tpu_custom_call.1} parent=5 // pred_region
        %s336 = ssub.s32 %s22, 1
        %s337 = sand.u32 %s47, 1
        %s338 = scalar_lea.sflag [#allocation5], %s337
        %s339 = sand.u32 %s47, 1
        %s340 = smul.addr %s339, 256
        %s341 = scalar_lea.vmem [#allocation4], %s340
        // Predicated region
        $region53: #{tpu_custom_call.1} parent=51 // pred_check
          %p342 = pneg %p60
        $region54: #{tpu_custom_call.1} parent=51 // pred_check_branch
          %344 = sbr.rel (%p342) target = $region56
        $region55: #{tpu_custom_call.1} parent=51 // pred_region
          %345 = dma.done %s338, 4096
        $region56: #{tpu_custom_call.1} parent=51 // pred_fallthru
          _
        // Predicated region
        $region57: #{tpu_custom_call.1} parent=51 // pred_check
          %p346 = pneg %p128
        $region58: #{tpu_custom_call.1} parent=51 // pred_check_branch
          %348 = sbr.rel (%p346) target = $region60
        $region59: #{tpu_custom_call.1} parent=51 // pred_region
          %349 = dma.done [#allocation8], 32
        $region60: #{tpu_custom_call.1} parent=51 // pred_fallthru
          _
        // Predicated region
        $region61: #{tpu_custom_call.1} parent=51 // pred_check
          %p350 = pneg %p149
        $region62: #{tpu_custom_call.1} parent=51 // pred_check_branch
          %352 = sbr.rel (%p350) target = $region64
        $region63: #{tpu_custom_call.1} parent=51 // pred_region
          %353 = dma.done [#allocation8], 12288
        $region64: #{tpu_custom_call.1} parent=51 // pred_fallthru
          _
        // Predicated region
        $region65: #{tpu_custom_call.1} parent=51 // pred_check
          %p354 = pneg %p191
        $region66: #{tpu_custom_call.1} parent=51 // pred_check_branch
          %356 = sbr.rel (%p354) target = $region68
        $region67: #{tpu_custom_call.1} parent=51 // pred_region
          %357 = dma.done [#allocation11], 4096
        $region68: #{tpu_custom_call.1} parent=51 // pred_fallthru
          _
        %s358 = sand.u32 %s47, 1
        %s359 = scalar_lea.sflag [#allocation5], %s358
        %s360 = sand.u32 %s47, 1
        %s361 = smul.addr %s360, 256
        %s362 = scalar_lea.vmem [#allocation4], %s361
        %p363 = pneg %p60
        %p364 = pneg %p57
        %p365 = scmp.lt.s32.totalorder %s31, 1
        %s366 = scalar_select %p365, %s31, 1
        %s367 = scalar_lea.vmem %s1, %s366
        %p368 = pneg %p86
        %p369 = pneg %p83
        %p370 = pneg %p107
        %p371 = pneg %p104
        %p372 = pneg %p128
        %p373 = pneg %p125
        %p374 = pneg %p149
        %p375 = pneg %p146
        %p376 = pneg %p170
        %p377 = pneg %p167
        %p378 = pneg %p191
        %p379 = pneg %p188
        %p380 = pneg %p212
        %p381 = pneg %p209
        %p382 = pneg %p238
        %p383 = pneg %p235
        %s384 = sand.u32 %s225, 1
        %s385 = scalar_lea.sflag [#allocation6], %s384
        %s386 = sand.u32 %s225, 1
        %s387 = smul.addr %s386, 256
        %s388 = scalar_lea.vmem [#allocation12], %s387
        %p389 = scmp.lt.s32.totalorder %s31, 1
        %s390 = scalar_select %p389, %s31, 1
        %s391 = scalar_lea.vmem %s1, %s390
        %p393 = scmp.eq.s32.totalorder %s32, 0
        // Predicated region
        $region69: #{tpu_custom_call.1} parent=51 // pred_check
          %p394 = pneg %p393
        $region70: #{tpu_custom_call.1} parent=51 // pred_check_branch
          %396 = sbr.rel (%p394) target = $region72
        $region71: #{tpu_custom_call.1} parent=51 // pred_region
          %v397 = vld [vmem:[%s341] sm:$0xff]
          %v398 = vld [vmem:[%s341 + $0x8] sm:$0xff]
          %v399 = vld [vmem:[%s341 + $0x10] sm:$0xff]
          %v400 = vld [vmem:[%s341 + $0x18] sm:$0xff]
          %v401 = vld [vmem:[%s341 + $0x20] sm:$0xff]
          %v402 = vld [vmem:[%s341 + $0x28] sm:$0xff]
          %v403 = vld [vmem:[%s341 + $0x30] sm:$0xff]
          %v404 = vld [vmem:[%s341 + $0x38] sm:$0xff]
          %v405 = vld [vmem:[%s341 + $0x40] sm:$0xff]
          %v406 = vld [vmem:[%s341 + $0x48] sm:$0xff]
          %v407 = vld [vmem:[%s341 + $0x50] sm:$0xff]
          %v408 = vld [vmem:[%s341 + $0x58] sm:$0xff]
          %v409 = vld [vmem:[%s341 + $0x60] sm:$0xff]
          %v410 = vld [vmem:[%s341 + $0x68] sm:$0xff]
          %v411 = vld [vmem:[%s341 + $0x70] sm:$0xff]
          %v412 = vld [vmem:[%s341 + $0x78] sm:$0xff]
          %v413 = vld [vmem:[%s341 + $0x80] sm:$0xff]
          %v414 = vld [vmem:[%s341 + $0x88] sm:$0xff]
          %v415 = vld [vmem:[%s341 + $0x90] sm:$0xff]
          %v416 = vld [vmem:[%s341 + $0x98] sm:$0xff]
          %v417 = vld [vmem:[%s341 + $0xa0] sm:$0xff]
          %v418 = vld [vmem:[%s341 + $0xa8] sm:$0xff]
          %v419 = vld [vmem:[%s341 + $0xb0] sm:$0xff]
          %v420 = vld [vmem:[%s341 + $0xb8] sm:$0xff]
          %v421 = vld [vmem:[%s341 + $0xc0] sm:$0xff]
          %v422 = vld [vmem:[%s341 + $0xc8] sm:$0xff]
          %v423 = vld [vmem:[%s341 + $0xd0] sm:$0xff]
          %v424 = vld [vmem:[%s341 + $0xd8] sm:$0xff]
          %v425 = vld [vmem:[%s341 + $0xe0] sm:$0xff]
          %v426 = vld [vmem:[%s341 + $0xe8] sm:$0xff]
          %v427 = vld [vmem:[%s341 + $0xf0] sm:$0xff]
          %v428 = vld [vmem:[%s341 + $0xf8] sm:$0xff]
          %v429 = vadd.f32 %v397, %v398
          %430 = vadd.xlane.f32.xlu0 %v429
          %v431 = vpop.xlane.xlu0 %430
          %v432 = vadd.f32 %v399, %v400
          %433 = vadd.xlane.f32.xlu0 %v432
          %v434 = vpop.xlane.xlu0 %433
          %v435 = vadd.f32 %v401, %v402
          %436 = vadd.xlane.f32.xlu0 %v435
          %v437 = vpop.xlane.xlu0 %436
          %v438 = vadd.f32 %v403, %v404
          %439 = vadd.xlane.f32.xlu0 %v438
          %v440 = vpop.xlane.xlu0 %439
          %v441 = vadd.f32 %v405, %v406
          %442 = vadd.xlane.f32.xlu0 %v441
          %v443 = vpop.xlane.xlu0 %442
          %v444 = vadd.f32 %v407, %v408
          %445 = vadd.xlane.f32.xlu0 %v444
          %v446 = vpop.xlane.xlu0 %445
          %v447 = vadd.f32 %v409, %v410
          %448 = vadd.xlane.f32.xlu0 %v447
          %v449 = vpop.xlane.xlu0 %448
          %v450 = vadd.f32 %v411, %v412
          %451 = vadd.xlane.f32.xlu0 %v450
          %v452 = vpop.xlane.xlu0 %451
          %v453 = vadd.f32 %v413, %v414
          %454 = vadd.xlane.f32.xlu0 %v453
          %v455 = vpop.xlane.xlu0 %454
          %v456 = vadd.f32 %v415, %v416
          %457 = vadd.xlane.f32.xlu0 %v456
          %v458 = vpop.xlane.xlu0 %457
          %v459 = vadd.f32 %v417, %v418
          %460 = vadd.xlane.f32.xlu0 %v459
          %v461 = vpop.xlane.xlu0 %460
          %v462 = vadd.f32 %v419, %v420
          %463 = vadd.xlane.f32.xlu0 %v462
          %v464 = vpop.xlane.xlu0 %463
          %v465 = vadd.f32 %v421, %v422
          %466 = vadd.xlane.f32.xlu0 %v465
          %v467 = vpop.xlane.xlu0 %466
          %v468 = vadd.f32 %v423, %v424
          %469 = vadd.xlane.f32.xlu0 %v468
          %v470 = vpop.xlane.xlu0 %469
          %v471 = vadd.f32 %v425, %v426
          %472 = vadd.xlane.f32.xlu0 %v471
          %v473 = vpop.xlane.xlu0 %472
          %v474 = vadd.f32 %v427, %v428
          %475 = vadd.xlane.f32.xlu0 %v474
          %v476 = vpop.xlane.xlu0 %475
          %v477 = vrcp.pop 256.0
          %v478 = vmul.f32 %v431, %v477
          %v479 = vmul.f32 %v434, %v477
          %v480 = vmul.f32 %v437, %v477
          %v481 = vmul.f32 %v440, %v477
          %v482 = vmul.f32 %v443, %v477
          %v483 = vmul.f32 %v446, %v477
          %v484 = vmul.f32 %v449, %v477
          %v485 = vmul.f32 %v452, %v477
          %v486 = vmul.f32 %v455, %v477
          %v487 = vmul.f32 %v458, %v477
          %v488 = vmul.f32 %v461, %v477
          %v489 = vmul.f32 %v464, %v477
          %v490 = vmul.f32 %v467, %v477
          %v491 = vmul.f32 %v470, %v477
          %v492 = vmul.f32 %v473, %v477
          %v493 = vmul.f32 %v476, %v477
          %v494 = vsub.f32 %v397, %v478
          %v495 = vsub.f32 %v398, %v478
          %v496 = vsub.f32 %v399, %v479
          %v497 = vsub.f32 %v400, %v479
          %v498 = vsub.f32 %v401, %v480
          %v499 = vsub.f32 %v402, %v480
          %v500 = vsub.f32 %v403, %v481
          %v501 = vsub.f32 %v404, %v481
          %v502 = vsub.f32 %v405, %v482
          %v503 = vsub.f32 %v406, %v482
          %v504 = vsub.f32 %v407, %v483
          %v505 = vsub.f32 %v408, %v483
          %v506 = vsub.f32 %v409, %v484
          %v507 = vsub.f32 %v410, %v484
          %v508 = vsub.f32 %v411, %v485
          %v509 = vsub.f32 %v412, %v485
          %v510 = vsub.f32 %v413, %v486
          %v511 = vsub.f32 %v414, %v486
          %v512 = vsub.f32 %v415, %v487
          %v513 = vsub.f32 %v416, %v487
          %v514 = vsub.f32 %v417, %v488
          %v515 = vsub.f32 %v418, %v488
          %v516 = vsub.f32 %v419, %v489
          %v517 = vsub.f32 %v420, %v489
          %v518 = vsub.f32 %v421, %v490
          %v519 = vsub.f32 %v422, %v490
          %v520 = vsub.f32 %v423, %v491
          %v521 = vsub.f32 %v424, %v491
          %v522 = vsub.f32 %v425, %v492
          %v523 = vsub.f32 %v426, %v492
          %v524 = vsub.f32 %v427, %v493
          %v525 = vsub.f32 %v428, %v493
          %v526 = vmul.f32 %v494, %v494
          %v527 = vmul.f32 %v495, %v495
          %v528 = vmul.f32 %v496, %v496
          %v529 = vmul.f32 %v497, %v497
          %v530 = vmul.f32 %v498, %v498
          %v531 = vmul.f32 %v499, %v499
          %v532 = vmul.f32 %v500, %v500
          %v533 = vmul.f32 %v501, %v501
          %v534 = vmul.f32 %v502, %v502
          %v535 = vmul.f32 %v503, %v503
          %v536 = vmul.f32 %v504, %v504
          %v537 = vmul.f32 %v505, %v505
          %v538 = vmul.f32 %v506, %v506
          %v539 = vmul.f32 %v507, %v507
          %v540 = vmul.f32 %v508, %v508
          %v541 = vmul.f32 %v509, %v509
          %v542 = vmul.f32 %v510, %v510
          %v543 = vmul.f32 %v511, %v511
          %v544 = vmul.f32 %v512, %v512
          %v545 = vmul.f32 %v513, %v513
          %v546 = vmul.f32 %v514, %v514
          %v547 = vmul.f32 %v515, %v515
          %v548 = vmul.f32 %v516, %v516
          %v549 = vmul.f32 %v517, %v517
          %v550 = vmul.f32 %v518, %v518
          %v551 = vmul.f32 %v519, %v519
          %v552 = vmul.f32 %v520, %v520
          %v553 = vmul.f32 %v521, %v521
          %v554 = vmul.f32 %v522, %v522
          %v555 = vmul.f32 %v523, %v523
          %v556 = vmul.f32 %v524, %v524
          %v557 = vmul.f32 %v525, %v525
          %v558 = vadd.f32 %v526, %v527
          %559 = vadd.xlane.f32.xlu0 %v558
          %v560 = vpop.xlane.xlu0 %559
          %v561 = vadd.f32 %v528, %v529
          %562 = vadd.xlane.f32.xlu0 %v561
          %v563 = vpop.xlane.xlu0 %562
          %v564 = vadd.f32 %v530, %v531
          %565 = vadd.xlane.f32.xlu0 %v564
          %v566 = vpop.xlane.xlu0 %565
          %v567 = vadd.f32 %v532, %v533
          %568 = vadd.xlane.f32.xlu0 %v567
          %v569 = vpop.xlane.xlu0 %568
          %v570 = vadd.f32 %v534, %v535
          %571 = vadd.xlane.f32.xlu0 %v570
          %v572 = vpop.xlane.xlu0 %571
          %v573 = vadd.f32 %v536, %v537
          %574 = vadd.xlane.f32.xlu0 %v573
          %v575 = vpop.xlane.xlu0 %574
          %v576 = vadd.f32 %v538, %v539
          %577 = vadd.xlane.f32.xlu0 %v576
          %v578 = vpop.xlane.xlu0 %577
          %v579 = vadd.f32 %v540, %v541
          %580 = vadd.xlane.f32.xlu0 %v579
          %v581 = vpop.xlane.xlu0 %580
          %v582 = vadd.f32 %v542, %v543
          %583 = vadd.xlane.f32.xlu0 %v582
          %v584 = vpop.xlane.xlu0 %583
          %v585 = vadd.f32 %v544, %v545
          %586 = vadd.xlane.f32.xlu0 %v585
          %v587 = vpop.xlane.xlu0 %586
          %v588 = vadd.f32 %v546, %v547
          %589 = vadd.xlane.f32.xlu0 %v588
          %v590 = vpop.xlane.xlu0 %589
          %v591 = vadd.f32 %v548, %v549
          %592 = vadd.xlane.f32.xlu0 %v591
          %v593 = vpop.xlane.xlu0 %592
          %v594 = vadd.f32 %v550, %v551
          %595 = vadd.xlane.f32.xlu0 %v594
          %v596 = vpop.xlane.xlu0 %595
          %v597 = vadd.f32 %v552, %v553
          %598 = vadd.xlane.f32.xlu0 %v597
          %v599 = vpop.xlane.xlu0 %598
          %v600 = vadd.f32 %v554, %v555
          %601 = vadd.xlane.f32.xlu0 %v600
          %v602 = vpop.xlane.xlu0 %601
          %v603 = vadd.f32 %v556, %v557
          %604 = vadd.xlane.f32.xlu0 %v603
          %v605 = vpop.xlane.xlu0 %604
          %v606 = vmul.f32 %v560, %v477
          %v607 = vmul.f32 %v563, %v477
          %v608 = vmul.f32 %v566, %v477
          %v609 = vmul.f32 %v569, %v477
          %v610 = vmul.f32 %v572, %v477
          %v611 = vmul.f32 %v575, %v477
          %v612 = vmul.f32 %v578, %v477
          %v613 = vmul.f32 %v581, %v477
          %v614 = vmul.f32 %v584, %v477
          %v615 = vmul.f32 %v587, %v477
          %v616 = vmul.f32 %v590, %v477
          %v617 = vmul.f32 %v593, %v477
          %v618 = vmul.f32 %v596, %v477
          %v619 = vmul.f32 %v599, %v477
          %v620 = vmul.f32 %v602, %v477
          %v621 = vmul.f32 %v605, %v477
          %v622 = vadd.f32 %v606, 1e-12
          %v623 = vadd.f32 %v607, 1e-12
          %v624 = vadd.f32 %v608, 1e-12
          %v625 = vadd.f32 %v609, 1e-12
          %v626 = vadd.f32 %v610, 1e-12
          %v627 = vadd.f32 %v611, 1e-12
          %v628 = vadd.f32 %v612, 1e-12
          %v629 = vadd.f32 %v613, 1e-12
          %v630 = vadd.f32 %v614, 1e-12
          %v631 = vadd.f32 %v615, 1e-12
          %v632 = vadd.f32 %v616, 1e-12
          %v633 = vadd.f32 %v617, 1e-12
          %v634 = vadd.f32 %v618, 1e-12
          %v635 = vadd.f32 %v619, 1e-12
          %v636 = vadd.f32 %v620, 1e-12
          %v637 = vadd.f32 %v621, 1e-12
          %v638 = vrsqrt.pop %v622
          %v639 = vrsqrt.pop %v623
          %v640 = vrsqrt.pop %v624
          %v641 = vrsqrt.pop %v625
          %v642 = vrsqrt.pop %v626
          %v643 = vrsqrt.pop %v627
          %v644 = vrsqrt.pop %v628
          %v645 = vrsqrt.pop %v629
          %v646 = vrsqrt.pop %v630
          %v647 = vrsqrt.pop %v631
          %v648 = vrsqrt.pop %v632
          %v649 = vrsqrt.pop %v633
          %v650 = vrsqrt.pop %v634
          %v651 = vrsqrt.pop %v635
          %v652 = vrsqrt.pop %v636
          %v653 = vrsqrt.pop %v637
          %v654 = vmul.f32 %v494, %v638
          %v655 = vmul.f32 %v495, %v638
          %v656 = vmul.f32 %v496, %v639
          %v657 = vmul.f32 %v497, %v639
          %v658 = vmul.f32 %v498, %v640
          %v659 = vmul.f32 %v499, %v640
          %v660 = vmul.f32 %v500, %v641
          %v661 = vmul.f32 %v501, %v641
          %v662 = vmul.f32 %v502, %v642
          %v663 = vmul.f32 %v503, %v642
          %v664 = vmul.f32 %v504, %v643
          %v665 = vmul.f32 %v505, %v643
          %v666 = vmul.f32 %v506, %v644
          %v667 = vmul.f32 %v507, %v644
          %v668 = vmul.f32 %v508, %v645
          %v669 = vmul.f32 %v509, %v645
          %v670 = vmul.f32 %v510, %v646
          %v671 = vmul.f32 %v511, %v646
          %v672 = vmul.f32 %v512, %v647
          %v673 = vmul.f32 %v513, %v647
          %v674 = vmul.f32 %v514, %v648
          %v675 = vmul.f32 %v515, %v648
          %v676 = vmul.f32 %v516, %v649
          %v677 = vmul.f32 %v517, %v649
          %v678 = vmul.f32 %v518, %v650
          %v679 = vmul.f32 %v519, %v650
          %v680 = vmul.f32 %v520, %v651
          %v681 = vmul.f32 %v521, %v651
          %v682 = vmul.f32 %v522, %v652
          %v683 = vmul.f32 %v523, %v652
          %v684 = vmul.f32 %v524, %v653
          %v685 = vmul.f32 %v525, %v653
          %v686 = vld [vmem:[%s2] sm:$0x3]
          %v688 = vlaneseq
          %v689 = vshrl.u32 %v688, 7
          %v690 = vsub.s32 0, %v689
          %v691 = vrot.slane %v686, %v690
          %v692 = vlaneseq
          %v693 = vshrl.u32 %v692, 7
          %v694 = vsub.s32 1, %v693
          %v695 = vrot.slane %v686, %v694
          %v698 = vmul.f32 %v654, %v691
          %v699 = vmul.f32 %v655, %v695
          %v700 = vmul.f32 %v656, %v691
          %v701 = vmul.f32 %v657, %v695
          %v702 = vmul.f32 %v658, %v691
          %v703 = vmul.f32 %v659, %v695
          %v704 = vmul.f32 %v660, %v691
          %v705 = vmul.f32 %v661, %v695
          %v706 = vmul.f32 %v662, %v691
          %v707 = vmul.f32 %v663, %v695
          %v708 = vmul.f32 %v664, %v691
          %v709 = vmul.f32 %v665, %v695
          %v710 = vmul.f32 %v666, %v691
          %v711 = vmul.f32 %v667, %v695
          %v712 = vmul.f32 %v668, %v691
          %v713 = vmul.f32 %v669, %v695
          %v714 = vmul.f32 %v670, %v691
          %v715 = vmul.f32 %v671, %v695
          %v716 = vmul.f32 %v672, %v691
          %v717 = vmul.f32 %v673, %v695
          %v718 = vmul.f32 %v674, %v691
          %v719 = vmul.f32 %v675, %v695
          %v720 = vmul.f32 %v676, %v691
          %v721 = vmul.f32 %v677, %v695
          %v722 = vmul.f32 %v678, %v691
          %v723 = vmul.f32 %v679, %v695
          %v724 = vmul.f32 %v680, %v691
          %v725 = vmul.f32 %v681, %v695
          %v726 = vmul.f32 %v682, %v691
          %v727 = vmul.f32 %v683, %v695
          %v728 = vmul.f32 %v684, %v691
          %v729 = vmul.f32 %v685, %v695
          %v730 = vld [vmem:[#allocation7] sm:$0x3]
          %v732 = vlaneseq
          %v733 = vshrl.u32 %v732, 7
          %v734 = vsub.s32 0, %v733
          %v735 = vrot.slane %v730, %v734
          %v736 = vlaneseq
          %v737 = vshrl.u32 %v736, 7
          %v738 = vsub.s32 1, %v737
          %v739 = vrot.slane %v730, %v738
          %v742 = vadd.f32 %v698, %v735
          %v743 = vadd.f32 %v699, %v739
          %v744 = vadd.f32 %v700, %v735
          %v745 = vadd.f32 %v701, %v739
          %v746 = vadd.f32 %v702, %v735
          %v747 = vadd.f32 %v703, %v739
          %v748 = vadd.f32 %v704, %v735
          %v749 = vadd.f32 %v705, %v739
          %v750 = vadd.f32 %v706, %v735
          %v751 = vadd.f32 %v707, %v739
          %v752 = vadd.f32 %v708, %v735
          %v753 = vadd.f32 %v709, %v739
          %v754 = vadd.f32 %v710, %v735
          %v755 = vadd.f32 %v711, %v739
          %v756 = vadd.f32 %v712, %v735
          %v757 = vadd.f32 %v713, %v739
          %v758 = vadd.f32 %v714, %v735
          %v759 = vadd.f32 %v715, %v739
          %v760 = vadd.f32 %v716, %v735
          %v761 = vadd.f32 %v717, %v739
          %v762 = vadd.f32 %v718, %v735
          %v763 = vadd.f32 %v719, %v739
          %v764 = vadd.f32 %v720, %v735
          %v765 = vadd.f32 %v721, %v739
          %v766 = vadd.f32 %v722, %v735
          %v767 = vadd.f32 %v723, %v739
          %v768 = vadd.f32 %v724, %v735
          %v769 = vadd.f32 %v725, %v739
          %v770 = vadd.f32 %v726, %v735
          %v771 = vadd.f32 %v727, %v739
          %v772 = vadd.f32 %v728, %v735
          %v773 = vadd.f32 %v729, %v739
          %v774 = vpack.c.bf16 %v744, %v742
          %v775 = vpack.c.bf16 %v745, %v743
          %v776 = vpack.c.bf16 %v748, %v746
          %v777 = vpack.c.bf16 %v749, %v747
          %v778 = vpack.c.bf16 %v752, %v750
          %v779 = vpack.c.bf16 %v753, %v751
          %v780 = vpack.c.bf16 %v756, %v754
          %v781 = vpack.c.bf16 %v757, %v755
          %v782 = vpack.c.bf16 %v760, %v758
          %v783 = vpack.c.bf16 %v761, %v759
          %v784 = vpack.c.bf16 %v764, %v762
          %v785 = vpack.c.bf16 %v765, %v763
          %v786 = vpack.c.bf16 %v768, %v766
          %v787 = vpack.c.bf16 %v769, %v767
          %v788 = vpack.c.bf16 %v772, %v770
          %v789 = vpack.c.bf16 %v773, %v771
          %790 = vst [vmem:[#allocation2] sm:$0xff] %v774
          %791 = vst [vmem:[#allocation2 + $0x8] sm:$0xff] %v775
          %792 = vst [vmem:[#allocation2 + $0x10] sm:$0xff] %v776
          %793 = vst [vmem:[#allocation2 + $0x18] sm:$0xff] %v777
          %794 = vst [vmem:[#allocation2 + $0x20] sm:$0xff] %v778
          %795 = vst [vmem:[#allocation2 + $0x28] sm:$0xff] %v779
          %796 = vst [vmem:[#allocation2 + $0x30] sm:$0xff] %v780
          %797 = vst [vmem:[#allocation2 + $0x38] sm:$0xff] %v781
          %798 = vst [vmem:[#allocation2 + $0x40] sm:$0xff] %v782
          %799 = vst [vmem:[#allocation2 + $0x48] sm:$0xff] %v783
          %800 = vst [vmem:[#allocation2 + $0x50] sm:$0xff] %v784
          %801 = vst [vmem:[#allocation2 + $0x58] sm:$0xff] %v785
          %802 = vst [vmem:[#allocation2 + $0x60] sm:$0xff] %v786
          %803 = vst [vmem:[#allocation2 + $0x68] sm:$0xff] %v787
          %804 = vst [vmem:[#allocation2 + $0x70] sm:$0xff] %v788
          %805 = vst [vmem:[#allocation2 + $0x78] sm:$0xff] %v789
        $region72: #{tpu_custom_call.1} parent=51 // pred_fallthru
          _
        %v806 = vld [vmem:[#allocation2] sm:$0xff]
        %v807 = vld [vmem:[#allocation2 + $0x8] sm:$0xff]
        %v808 = vld [vmem:[#allocation2 + $0x10] sm:$0xff]
        %v809 = vld [vmem:[#allocation2 + $0x18] sm:$0xff]
        %v810 = vld [vmem:[#allocation2 + $0x20] sm:$0xff]
        %v811 = vld [vmem:[#allocation2 + $0x28] sm:$0xff]
        %v812 = vld [vmem:[#allocation2 + $0x30] sm:$0xff]
        %v813 = vld [vmem:[#allocation2 + $0x38] sm:$0xff]
        %v814 = vld [vmem:[#allocation2 + $0x40] sm:$0xff]
        %v815 = vld [vmem:[#allocation2 + $0x48] sm:$0xff]
        %v816 = vld [vmem:[#allocation2 + $0x50] sm:$0xff]
        %v817 = vld [vmem:[#allocation2 + $0x58] sm:$0xff]
        %v818 = vld [vmem:[#allocation2 + $0x60] sm:$0xff]
        %v819 = vld [vmem:[#allocation2 + $0x68] sm:$0xff]
        %v820 = vld [vmem:[#allocation2 + $0x70] sm:$0xff]
        %v821 = vld [vmem:[#allocation2 + $0x78] sm:$0xff]
        %s822 = smul.u32 %s32, 96
        %s823 = smul.addr %s822, 4
        %s824 = scalar_lea.vmem [#allocation9], %s823
        %v825 = vld [vmem:[%s824] sm:$0xff]
        %v826 = vld [vmem:[%s824 + $0x8] sm:$0xf]
        %v827 = vld [vmem:[%s824 + $0xc] sm:$0xff]
        %v828 = vld [vmem:[%s824 + $0x14] sm:$0xf]
        %v829 = vld [vmem:[%s824 + $0x18] sm:$0xff]
        %v830 = vld [vmem:[%s824 + $0x20] sm:$0xf]
        %v831 = vld [vmem:[%s824 + $0x24] sm:$0xff]
        %v832 = vld [vmem:[%s824 + $0x2c] sm:$0xf]
        %v833 = vld [vmem:[%s824 + $0x30] sm:$0xff]
        %v834 = vld [vmem:[%s824 + $0x38] sm:$0xf]
        %v835 = vld [vmem:[%s824 + $0x3c] sm:$0xff]
        %v836 = vld [vmem:[%s824 + $0x44] sm:$0xf]
        %v837 = vld [vmem:[%s824 + $0x48] sm:$0xff]
        %v838 = vld [vmem:[%s824 + $0x50] sm:$0xf]
        %v839 = vld [vmem:[%s824 + $0x54] sm:$0xff]
        %v840 = vld [vmem:[%s824 + $0x5c] sm:$0xf]
        %v841 = vld [vmem:[%s824 + $0x60] sm:$0xff]
        %v842 = vld [vmem:[%s824 + $0x68] sm:$0xf]
        %v843 = vld [vmem:[%s824 + $0x6c] sm:$0xff]
        %v844 = vld [vmem:[%s824 + $0x74] sm:$0xf]
        %v845 = vld [vmem:[%s824 + $0x78] sm:$0xff]
        %v846 = vld [vmem:[%s824 + $0x80] sm:$0xf]
        %v847 = vld [vmem:[%s824 + $0x84] sm:$0xff]
        %v848 = vld [vmem:[%s824 + $0x8c] sm:$0xf]
        %v849 = vld [vmem:[%s824 + $0x90] sm:$0xff]
        %v850 = vld [vmem:[%s824 + $0x98] sm:$0xf]
        %v851 = vld [vmem:[%s824 + $0x9c] sm:$0xff]
        %v852 = vld [vmem:[%s824 + $0xa4] sm:$0xf]
        %v853 = vld [vmem:[%s824 + $0xa8] sm:$0xff]
        %v854 = vld [vmem:[%s824 + $0xb0] sm:$0xf]
        %v855 = vld [vmem:[%s824 + $0xb4] sm:$0xff]
        %v856 = vld [vmem:[%s824 + $0xbc] sm:$0xf]
        %v857 = vld [vmem:[%s824 + $0xc0] sm:$0xff]
        %v858 = vld [vmem:[%s824 + $0xc8] sm:$0xf]
        %v859 = vld [vmem:[%s824 + $0xcc] sm:$0xff]
        %v860 = vld [vmem:[%s824 + $0xd4] sm:$0xf]
        %v861 = vld [vmem:[%s824 + $0xd8] sm:$0xff]
        %v862 = vld [vmem:[%s824 + $0xe0] sm:$0xf]
        %v863 = vld [vmem:[%s824 + $0xe4] sm:$0xff]
        %v864 = vld [vmem:[%s824 + $0xec] sm:$0xf]
        %v865 = vld [vmem:[%s824 + $0xf0] sm:$0xff]
        %v866 = vld [vmem:[%s824 + $0xf8] sm:$0xf]
        %v867 = vld [vmem:[%s824 + $0xfc] sm:$0xff]
        %v868 = vld [vmem:[%s824 + $0x104] sm:$0xf]
        %v869 = vld [vmem:[%s824 + $0x108] sm:$0xff]
        %v870 = vld [vmem:[%s824 + $0x110] sm:$0xf]
        %v871 = vld [vmem:[%s824 + $0x114] sm:$0xff]
        %v872 = vld [vmem:[%s824 + $0x11c] sm:$0xf]
        %v873 = vld [vmem:[%s824 + $0x120] sm:$0xff]
        %v874 = vld [vmem:[%s824 + $0x128] sm:$0xf]
        %v875 = vld [vmem:[%s824 + $0x12c] sm:$0xff]
        %v876 = vld [vmem:[%s824 + $0x134] sm:$0xf]
        %v877 = vld [vmem:[%s824 + $0x138] sm:$0xff]
        %v878 = vld [vmem:[%s824 + $0x140] sm:$0xf]
        %v879 = vld [vmem:[%s824 + $0x144] sm:$0xff]
        %v880 = vld [vmem:[%s824 + $0x14c] sm:$0xf]
        %v881 = vld [vmem:[%s824 + $0x150] sm:$0xff]
        %v882 = vld [vmem:[%s824 + $0x158] sm:$0xf]
        %v883 = vld [vmem:[%s824 + $0x15c] sm:$0xff]
        %v884 = vld [vmem:[%s824 + $0x164] sm:$0xf]
        %v885 = vld [vmem:[%s824 + $0x168] sm:$0xff]
        %v886 = vld [vmem:[%s824 + $0x170] sm:$0xf]
        %v887 = vld [vmem:[%s824 + $0x174] sm:$0xff]
        %v888 = vld [vmem:[%s824 + $0x17c] sm:$0xf]
        %s889 = smul.u32 %s32, 3
        %s890 = scalar_lea.vmem %s5, %s889
        %v891 = vld [vmem:[%s890] sm:$0x7]
        %v893 = vlaneseq
        %v894 = vshrl.u32 %v893, 7
        %v895 = vsub.s32 0, %v894
        %v896 = vrot.slane %v891, %v895
        %v897 = vlaneseq
        %v898 = vshrl.u32 %v897, 7
        %v899 = vsub.s32 1, %v898
        %v900 = vrot.slane %v891, %v899
        %v901 = vlaneseq
        %v902 = vshrl.u32 %v901, 7
        %v903 = vsub.s32 2, %v902
        %v904 = vrot.slane %v891, %v903
        %v972 = vunpack.c.l.b16 %v825
        %v973 = vunpack.c.h.b16 %v825
        %v974 = vunpack.c.l.b16 %v826
        %v975 = vunpack.c.l.b16 %v827
        %v976 = vunpack.c.h.b16 %v827
        %v977 = vunpack.c.l.b16 %v828
        %v978 = vunpack.c.l.b16 %v829
        %v979 = vunpack.c.h.b16 %v829
        %v980 = vunpack.c.l.b16 %v830
        %v981 = vunpack.c.l.b16 %v831
        %v982 = vunpack.c.h.b16 %v831
        %v983 = vunpack.c.l.b16 %v832
        %v984 = vunpack.c.l.b16 %v833
        %v985 = vunpack.c.h.b16 %v833
        %v986 = vunpack.c.l.b16 %v834
        %v987 = vunpack.c.l.b16 %v835
        %v988 = vunpack.c.h.b16 %v835
        %v989 = vunpack.c.l.b16 %v836
        %v990 = vunpack.c.l.b16 %v837
        %v991 = vunpack.c.h.b16 %v837
        %v992 = vunpack.c.l.b16 %v838
        %v993 = vunpack.c.l.b16 %v839
        %v994 = vunpack.c.h.b16 %v839
        %v995 = vunpack.c.l.b16 %v840
        %v996 = vunpack.c.l.b16 %v841
        %v997 = vunpack.c.h.b16 %v841
        %v998 = vunpack.c.l.b16 %v842
        %v999 = vunpack.c.l.b16 %v843
        %v1000 = vunpack.c.h.b16 %v843
        %v1001 = vunpack.c.l.b16 %v844
        %v1002 = vunpack.c.l.b16 %v845
        %v1003 = vunpack.c.h.b16 %v845
        %v1004 = vunpack.c.l.b16 %v846
        %v1005 = vunpack.c.l.b16 %v847
        %v1006 = vunpack.c.h.b16 %v847
        %v1007 = vunpack.c.l.b16 %v848
        %v1008 = vunpack.c.l.b16 %v849
        %v1009 = vunpack.c.h.b16 %v849
        %v1010 = vunpack.c.l.b16 %v850
        %v1011 = vunpack.c.l.b16 %v851
        %v1012 = vunpack.c.h.b16 %v851
        %v1013 = vunpack.c.l.b16 %v852
        %v1014 = vunpack.c.l.b16 %v853
        %v1015 = vunpack.c.h.b16 %v853
        %v1016 = vunpack.c.l.b16 %v854
        %v1017 = vunpack.c.l.b16 %v855
        %v1018 = vunpack.c.h.b16 %v855
        %v1019 = vunpack.c.l.b16 %v856
        %v1020 = vunpack.c.l.b16 %v857
        %v1021 = vunpack.c.h.b16 %v857
        %v1022 = vunpack.c.l.b16 %v858
        %v1023 = vunpack.c.l.b16 %v859
        %v1024 = vunpack.c.h.b16 %v859
        %v1025 = vunpack.c.l.b16 %v860
        %v1026 = vunpack.c.l.b16 %v861
        %v1027 = vunpack.c.h.b16 %v861
        %v1028 = vunpack.c.l.b16 %v862
        %v1029 = vunpack.c.l.b16 %v863
        %v1030 = vunpack.c.h.b16 %v863
        %v1031 = vunpack.c.l.b16 %v864
        %v1032 = vunpack.c.l.b16 %v865
        %v1033 = vunpack.c.h.b16 %v865
        %v1034 = vunpack.c.l.b16 %v866
        %v1035 = vunpack.c.l.b16 %v867
        %v1036 = vunpack.c.h.b16 %v867
        %v1037 = vunpack.c.l.b16 %v868
        %v1038 = vunpack.c.l.b16 %v869
        %v1039 = vunpack.c.h.b16 %v869
        %v1040 = vunpack.c.l.b16 %v870
        %v1041 = vunpack.c.l.b16 %v871
        %v1042 = vunpack.c.h.b16 %v871
        %v1043 = vunpack.c.l.b16 %v872
        %v1044 = vunpack.c.l.b16 %v873
        %v1045 = vunpack.c.h.b16 %v873
        %v1046 = vunpack.c.l.b16 %v874
        %v1047 = vunpack.c.l.b16 %v875
        %v1048 = vunpack.c.h.b16 %v875
        %v1049 = vunpack.c.l.b16 %v876
        %v1050 = vunpack.c.l.b16 %v877
        %v1051 = vunpack.c.h.b16 %v877
        %v1052 = vunpack.c.l.b16 %v878
        %v1053 = vunpack.c.l.b16 %v879
        %v1054 = vunpack.c.h.b16 %v879
        %v1055 = vunpack.c.l.b16 %v880
        %v1056 = vunpack.c.l.b16 %v881
        %v1057 = vunpack.c.h.b16 %v881
        %v1058 = vunpack.c.l.b16 %v882
        %v1059 = vunpack.c.l.b16 %v883
        %v1060 = vunpack.c.h.b16 %v883
        %v1061 = vunpack.c.l.b16 %v884
        %v1062 = vunpack.c.l.b16 %v885
        %v1063 = vunpack.c.h.b16 %v885
        %v1064 = vunpack.c.l.b16 %v886
        %v1065 = vunpack.c.l.b16 %v887
        %v1066 = vunpack.c.h.b16 %v887
        %v1067 = vunpack.c.l.b16 %v888
        %v1068 = vpack.c.b16 %v975, %v972
        %v1069 = vpack.c.b16 %v976, %v973
        %v1070 = vpack.c.b16 %v977, %v974
        %v1071 = vpack.c.b16 %v981, %v978
        %v1072 = vpack.c.b16 %v982, %v979
        %v1073 = vpack.c.b16 %v983, %v980
        %v1074 = vpack.c.b16 %v987, %v984
        %v1075 = vpack.c.b16 %v988, %v985
        %v1076 = vpack.c.b16 %v989, %v986
        %v1077 = vpack.c.b16 %v993, %v990
        %v1078 = vpack.c.b16 %v994, %v991
        %v1079 = vpack.c.b16 %v995, %v992
        %v1080 = vpack.c.b16 %v999, %v996
        %v1081 = vpack.c.b16 %v1000, %v997
        %v1082 = vpack.c.b16 %v1001, %v998
        %v1083 = vpack.c.b16 %v1005, %v1002
        %v1084 = vpack.c.b16 %v1006, %v1003
        %v1085 = vpack.c.b16 %v1007, %v1004
        %v1086 = vpack.c.b16 %v1011, %v1008
        %v1087 = vpack.c.b16 %v1012, %v1009
        %v1088 = vpack.c.b16 %v1013, %v1010
        %v1089 = vpack.c.b16 %v1017, %v1014
        %v1090 = vpack.c.b16 %v1018, %v1015
        %v1091 = vpack.c.b16 %v1019, %v1016
        %v1092 = vpack.c.b16 %v1023, %v1020
        %v1093 = vpack.c.b16 %v1024, %v1021
        %v1094 = vpack.c.b16 %v1025, %v1022
        %v1095 = vpack.c.b16 %v1029, %v1026
        %v1096 = vpack.c.b16 %v1030, %v1027
        %v1097 = vpack.c.b16 %v1031, %v1028
        %v1098 = vpack.c.b16 %v1035, %v1032
        %v1099 = vpack.c.b16 %v1036, %v1033
        %v1100 = vpack.c.b16 %v1037, %v1034
        %v1101 = vpack.c.b16 %v1041, %v1038
        %v1102 = vpack.c.b16 %v1042, %v1039
        %v1103 = vpack.c.b16 %v1043, %v1040
        %v1104 = vpack.c.b16 %v1047, %v1044
        %v1105 = vpack.c.b16 %v1048, %v1045
        %v1106 = vpack.c.b16 %v1049, %v1046
        %v1107 = vpack.c.b16 %v1053, %v1050
        %v1108 = vpack.c.b16 %v1054, %v1051
        %v1109 = vpack.c.b16 %v1055, %v1052
        %v1110 = vpack.c.b16 %v1059, %v1056
        %v1111 = vpack.c.b16 %v1060, %v1057
        %v1112 = vpack.c.b16 %v1061, %v1058
        %v1113 = vpack.c.b16 %v1065, %v1062
        %v1114 = vpack.c.b16 %v1066, %v1063
        %v1115 = vpack.c.b16 %v1067, %v1064
        %1164 = vmatprep.subr.bf16.mxu0 %v1069
        %1165 = vmatpush1.bf16.msra.mxu0 %v1068
        %1166 = vmatprep.subr.bf16.mxu0 %v1072
        %1167 = vmatpush1.bf16.msra.mxu0 %v1071
        %1168 = vmatprep.subr.bf16.mxu0 %v1075
        %1169 = vmatpush1.bf16.msra.mxu0 %v1074
        %1170 = vmatprep.subr.bf16.mxu0 %v1078
        %1171 = vmatpush1.bf16.msra.mxu0 %v1077
        %1172 = vmatprep.subr.bf16.mxu0 %v1081
        %1173 = vmatpush1.bf16.msra.mxu0 %v1080
        %1174 = vmatprep.subr.bf16.mxu0 %v1084
        %1175 = vmatpush1.bf16.msra.mxu0 %v1083
        %1176 = vmatprep.subr.bf16.mxu0 %v1087
        %1177 = vmatpush1.bf16.msra.mxu0 %v1086
        %1178 = vmatprep.subr.bf16.mxu0 %v1090
        %1179 = vmatpush1.bf16.msra.mxu0 %v1089
        %1180 = vmatprep.subr.bf16.mxu0 %v1093
        %1181 = vmatpush1.bf16.msra.mxu0 %v1092
        %1182 = vmatprep.subr.bf16.mxu0 %v1096
        %1183 = vmatpush1.bf16.msra.mxu0 %v1095
        %1184 = vmatprep.subr.bf16.mxu0 %v1099
        %1185 = vmatpush1.bf16.msra.mxu0 %v1098
        %1186 = vmatprep.subr.bf16.mxu0 %v1102
        %1187 = vmatpush1.bf16.msra.mxu0 %v1101
        %1188 = vmatprep.subr.bf16.mxu0 %v1105
        %1189 = vmatpush1.bf16.msra.mxu0 %v1104
        %1190 = vmatprep.subr.bf16.mxu0 %v1108
        %1191 = vmatpush1.bf16.msra.mxu0 %v1107
        %1192 = vmatprep.subr.bf16.mxu0 %v1111
        %1193 = vmatpush1.bf16.msra.mxu0 %v1110
        %1194 = vmatprep.subr.bf16.mxu0 %v1114
        %1195 = vmatpush1.bf16.msra.mxu0 %v1113
        %1196 = vmatprep.mubr.bf16.mxu0 %v807
        %1197 = vmatmul.mubr.bf16.gmra.mrb[0].mxu0 %v806
        %v1198 = vpop.f32.mrb[0].mxu0
        %v1199 = vadd.f32 %v896, %v1198
        %v1200 = vpop.f32.mrb[0].mxu0
        %v1201 = vadd.f32 %v900, %v1200
        %v1202 = vpop.f32.mrb[0].mxu0
        %v1203 = vadd.f32 %v896, %v1202
        %v1204 = vpop.f32.mrb[0].mxu0
        %v1205 = vadd.f32 %v900, %v1204
        %1206 = vmatprep.mubr.bf16.mxu0 %v809
        %1207 = vmatmul.mubr.bf16.gmra.mrb[0].mxu0 %v808
        %v1208 = vpop.f32.mrb[0].mxu0
        %v1209 = vadd.f32 %v896, %v1208
        %v1210 = vpop.f32.mrb[0].mxu0
        %v1211 = vadd.f32 %v900, %v1210
        %v1212 = vpop.f32.mrb[0].mxu0
        %v1213 = vadd.f32 %v896, %v1212
        %v1214 = vpop.f32.mrb[0].mxu0
        %v1215 = vadd.f32 %v900, %v1214
        %1216 = vmatprep.mubr.bf16.mxu0 %v811
        %1217 = vmatmul.mubr.bf16.gmra.mrb[0].mxu0 %v810
        %v1218 = vpop.f32.mrb[0].mxu0
        %v1219 = vadd.f32 %v896, %v1218
        %v1220 = vpop.f32.mrb[0].mxu0
        %v1221 = vadd.f32 %v900, %v1220
        %v1222 = vpop.f32.mrb[0].mxu0
        %v1223 = vadd.f32 %v896, %v1222
        %v1224 = vpop.f32.mrb[0].mxu0
        %v1225 = vadd.f32 %v900, %v1224
        %1226 = vmatprep.mubr.bf16.mxu0 %v813
        %1227 = vmatmul.mubr.bf16.gmra.mrb[0].mxu0 %v812
        %v1228 = vpop.f32.mrb[0].mxu0
        %v1229 = vadd.f32 %v896, %v1228
        %v1230 = vpop.f32.mrb[0].mxu0
        %v1231 = vadd.f32 %v900, %v1230
        %v1232 = vpop.f32.mrb[0].mxu0
        %v1233 = vadd.f32 %v896, %v1232
        %v1234 = vpop.f32.mrb[0].mxu0
        %v1235 = vadd.f32 %v900, %v1234
        %1236 = vmatprep.mubr.bf16.mxu0 %v815
        %1237 = vmatmul.mubr.bf16.gmra.mrb[0].mxu0 %v814
        %v1238 = vpop.f32.mrb[0].mxu0
        %v1239 = vadd.f32 %v896, %v1238
        %v1240 = vpop.f32.mrb[0].mxu0
        %v1241 = vadd.f32 %v900, %v1240
        %v1242 = vpop.f32.mrb[0].mxu0
        %v1243 = vadd.f32 %v896, %v1242
        %v1244 = vpop.f32.mrb[0].mxu0
        %v1245 = vadd.f32 %v900, %v1244
        %1246 = vmatprep.mubr.bf16.mxu0 %v817
        %1247 = vmatmul.mubr.bf16.gmra.mrb[0].mxu0 %v816
        %v1248 = vpop.f32.mrb[0].mxu0
        %v1249 = vadd.f32 %v896, %v1248
        %v1250 = vpop.f32.mrb[0].mxu0
        %v1251 = vadd.f32 %v900, %v1250
        %v1252 = vpop.f32.mrb[0].mxu0
        %v1253 = vadd.f32 %v896, %v1252
        %v1254 = vpop.f32.mrb[0].mxu0
        %v1255 = vadd.f32 %v900, %v1254
        %1256 = vmatprep.mubr.bf16.mxu0 %v819
        %1257 = vmatmul.mubr.bf16.gmra.mrb[0].mxu0 %v818
        %v1258 = vpop.f32.mrb[0].mxu0
        %v1259 = vadd.f32 %v896, %v1258
        %v1260 = vpop.f32.mrb[0].mxu0
        %v1261 = vadd.f32 %v900, %v1260
        %v1262 = vpop.f32.mrb[0].mxu0
        %v1263 = vadd.f32 %v896, %v1262
        %v1264 = vpop.f32.mrb[0].mxu0
        %v1265 = vadd.f32 %v900, %v1264
        %1266 = vmatprep.mubr.bf16.mxu0 %v821
        %1267 = vmatmul.mubr.bf16.gmra.mrb[0].mxu0 %v820
        %v1268 = vpop.f32.mrb[0].mxu0
        %v1269 = vadd.f32 %v896, %v1268
        %v1270 = vpop.f32.mrb[0].mxu0
        %v1271 = vadd.f32 %v900, %v1270
        %v1272 = vpop.f32.mrb[0].mxu0
        %v1273 = vadd.f32 %v896, %v1272
        %v1274 = vpop.f32.mrb[0].mxu0
        %v1275 = vadd.f32 %v900, %v1274
        %1276 = vdwg.mxu0
        %1277 = vmatprep.subr.bf16.mxu0 0
        %1278 = vmatpush1.bf16.msra.mxu0 %v1070
        %1279 = vmatprep.subr.bf16.mxu0 0
        %1280 = vmatpush1.bf16.msra.mxu0 %v1073
        %1281 = vmatprep.subr.bf16.mxu0 0
        %1282 = vmatpush1.bf16.msra.mxu0 %v1076
        %1283 = vmatprep.subr.bf16.mxu0 0
        %1284 = vmatpush1.bf16.msra.mxu0 %v1079
        %1285 = vmatprep.subr.bf16.mxu0 0
        %1286 = vmatpush1.bf16.msra.mxu0 %v1082
        %1287 = vmatprep.subr.bf16.mxu0 0
        %1288 = vmatpush1.bf16.msra.mxu0 %v1085
        %1289 = vmatprep.subr.bf16.mxu0 0
        %1290 = vmatpush1.bf16.msra.mxu0 %v1088
        %1291 = vmatprep.subr.bf16.mxu0 0
        %1292 = vmatpush1.bf16.msra.mxu0 %v1091
        %1293 = vmatprep.subr.bf16.mxu0 0
        %1294 = vmatpush1.bf16.msra.mxu0 %v1094
        %1295 = vmatprep.subr.bf16.mxu0 0
        %1296 = vmatpush1.bf16.msra.mxu0 %v1097
        %1297 = vmatprep.subr.bf16.mxu0 0
        %1298 = vmatpush1.bf16.msra.mxu0 %v1100
        %1299 = vmatprep.subr.bf16.mxu0 0
        %1300 = vmatpush1.bf16.msra.mxu0 %v1103
        %1301 = vmatprep.subr.bf16.mxu0 0
        %1302 = vmatpush1.bf16.msra.mxu0 %v1106
        %1303 = vmatprep.subr.bf16.mxu0 0
        %1304 = vmatpush1.bf16.msra.mxu0 %v1109
        %1305 = vmatprep.subr.bf16.mxu0 0
        %1306 = vmatpush1.bf16.msra.mxu0 %v1112
        %1307 = vmatprep.subr.bf16.mxu0 0
        %1308 = vmatpush1.bf16.msra.mxu0 %v1115
        %1309 = vmatprep.mubr.bf16.mxu0 %v807
        %1310 = vmatmul.mubr.bf16.gmra.mrb[0].mxu0 %v806
        %v1311 = vpop.f32.mrb[0].mxu0
        %v1312 = vadd.f32 %v904, %v1311
        %v1313 = vpop.f32.mrb[0].mxu0
        %v1314 = vpop.f32.mrb[0].mxu0
        %v1315 = vadd.f32 %v904, %v1314
        %v1316 = vpop.f32.mrb[0].mxu0
        %1317 = vmatprep.mubr.bf16.mxu0 %v809
        %1318 = vmatmul.mubr.bf16.gmra.mrb[0].mxu0 %v808
        %v1319 = vpop.f32.mrb[0].mxu0
        %v1320 = vadd.f32 %v904, %v1319
        %v1321 = vpop.f32.mrb[0].mxu0
        %v1322 = vpop.f32.mrb[0].mxu0
        %v1323 = vadd.f32 %v904, %v1322
        %v1324 = vpop.f32.mrb[0].mxu0
        %1325 = vmatprep.mubr.bf16.mxu0 %v811
        %1326 = vmatmul.mubr.bf16.gmra.mrb[0].mxu0 %v810
        %v1327 = vpop.f32.mrb[0].mxu0
        %v1328 = vadd.f32 %v904, %v1327
        %v1329 = vpop.f32.mrb[0].mxu0
        %v1330 = vpop.f32.mrb[0].mxu0
        %v1331 = vadd.f32 %v904, %v1330
        %v1332 = vpop.f32.mrb[0].mxu0
        %1333 = vmatprep.mubr.bf16.mxu0 %v813
        %1334 = vmatmul.mubr.bf16.gmra.mrb[0].mxu0 %v812
        %v1335 = vpop.f32.mrb[0].mxu0
        %v1336 = vadd.f32 %v904, %v1335
        %v1337 = vpop.f32.mrb[0].mxu0
        %v1338 = vpop.f32.mrb[0].mxu0
        %v1339 = vadd.f32 %v904, %v1338
        %v1340 = vpop.f32.mrb[0].mxu0
        %1341 = vmatprep.mubr.bf16.mxu0 %v815
        %1342 = vmatmul.mubr.bf16.gmra.mrb[0].mxu0 %v814
        %v1343 = vpop.f32.mrb[0].mxu0
        %v1344 = vadd.f32 %v904, %v1343
        %v1345 = vpop.f32.mrb[0].mxu0
        %v1346 = vpop.f32.mrb[0].mxu0
        %v1347 = vadd.f32 %v904, %v1346
        %v1348 = vpop.f32.mrb[0].mxu0
        %1349 = vmatprep.mubr.bf16.mxu0 %v817
        %1350 = vmatmul.mubr.bf16.gmra.mrb[0].mxu0 %v816
        %v1351 = vpop.f32.mrb[0].mxu0
        %v1352 = vadd.f32 %v904, %v1351
        %v1353 = vpop.f32.mrb[0].mxu0
        %v1354 = vpop.f32.mrb[0].mxu0
        %v1355 = vadd.f32 %v904, %v1354
        %v1356 = vpop.f32.mrb[0].mxu0
        %1357 = vmatprep.mubr.bf16.mxu0 %v819
        %1358 = vmatmul.mubr.bf16.gmra.mrb[0].mxu0 %v818
        %v1359 = vpop.f32.mrb[0].mxu0
        %v1360 = vadd.f32 %v904, %v1359
        %v1361 = vpop.f32.mrb[0].mxu0
        %v1362 = vpop.f32.mrb[0].mxu0
        %v1363 = vadd.f32 %v904, %v1362
        %v1364 = vpop.f32.mrb[0].mxu0
        %1365 = vmatprep.mubr.bf16.mxu0 %v821
        %1366 = vmatmul.mubr.bf16.gmra.mrb[0].mxu0 %v820
        %v1367 = vpop.f32.mrb[0].mxu0
        %v1368 = vadd.f32 %v904, %v1367
        %v1369 = vpop.f32.mrb[0].mxu0
        %v1370 = vpop.f32.mrb[0].mxu0
        %v1371 = vadd.f32 %v904, %v1370
        %v1372 = vpop.f32.mrb[0].mxu0
        %1373 = vdwg.mxu0
        %v1374 = vpack.c.bf16 %v1203, %v1199
        %v1375 = vpack.c.bf16 %v1213, %v1209
        %v1376 = vpack.c.bf16 %v1223, %v1219
        %v1377 = vpack.c.bf16 %v1233, %v1229
        %v1378 = vpack.c.bf16 %v1243, %v1239
        %v1379 = vpack.c.bf16 %v1253, %v1249
        %v1380 = vpack.c.bf16 %v1263, %v1259
        %v1381 = vpack.c.bf16 %v1273, %v1269
        %v1382 = vpack.c.bf16 %v1205, %v1201
        %v1383 = vpack.c.bf16 %v1215, %v1211
        %v1384 = vpack.c.bf16 %v1225, %v1221
        %v1385 = vpack.c.bf16 %v1235, %v1231
        %v1386 = vpack.c.bf16 %v1245, %v1241
        %v1387 = vpack.c.bf16 %v1255, %v1251
        %v1388 = vpack.c.bf16 %v1265, %v1261
        %v1389 = vpack.c.bf16 %v1275, %v1271
        %v1390 = vpack.c.bf16 %v1315, %v1312
        %v1391 = vpack.c.bf16 %v1323, %v1320
        %v1392 = vpack.c.bf16 %v1331, %v1328
        %v1393 = vpack.c.bf16 %v1339, %v1336
        %v1394 = vpack.c.bf16 %v1347, %v1344
        %v1395 = vpack.c.bf16 %v1355, %v1352
        %v1396 = vpack.c.bf16 %v1363, %v1360
        %v1397 = vpack.c.bf16 %v1371, %v1368
        %v1398 = vld [vmem:[%s391] sm:$0x1]
        %v1400 = vlaneseq
        %v1401 = vshrl.u32 %v1400, 7
        %v1402 = vsub.s32 0, %v1401
        %v1403 = vrot.slane %v1398, %v1402
        %vm1405 = vcmask 523264
        %v1407 = vsel %vm1405, %v1374, 0
        %v1410 = vsel %vm1405, %v1375, 0
        %v1413 = vsel %vm1405, %v1376, 0
        %v1416 = vsel %vm1405, %v1377, 0
        %v1419 = vsel %vm1405, %v1378, 0
        %v1422 = vsel %vm1405, %v1379, 0
        %v1425 = vsel %vm1405, %v1380, 0
        %v1428 = vsel %vm1405, %v1381, 0
        %v1431 = vsel %vm1405, %v1382, 0
        %v1434 = vsel %vm1405, %v1383, 0
        %v1437 = vsel %vm1405, %v1384, 0
        %v1440 = vsel %vm1405, %v1385, 0
        %v1443 = vsel %vm1405, %v1386, 0
        %v1446 = vsel %vm1405, %v1387, 0
        %v1449 = vsel %vm1405, %v1388, 0
        %v1452 = vsel %vm1405, %v1389, 0
        %1454 = vmatprep.subr.bf16.mxu0 0
        %1455 = vmatpush1.bf16.xpose.msra.mxu0 %v1431
        %1456 = vmatprep.subr.bf16.mxu0 0
        %1457 = vmatpush1.bf16.xpose.msra.mxu0 %v1434
        %1458 = vmatprep.subr.bf16.mxu0 0
        %1459 = vmatpush1.bf16.xpose.msra.mxu0 %v1437
        %1460 = vmatprep.subr.bf16.mxu0 0
        %1461 = vmatpush1.bf16.xpose.msra.mxu0 %v1440
        %1462 = vmatprep.subr.bf16.mxu0 0
        %1463 = vmatpush1.bf16.xpose.msra.mxu0 %v1443
        %1464 = vmatprep.subr.bf16.mxu0 0
        %1465 = vmatpush1.bf16.xpose.msra.mxu0 %v1446
        %1466 = vmatprep.subr.bf16.mxu0 0
        %1467 = vmatpush1.bf16.xpose.msra.mxu0 %v1449
        %1468 = vmatprep.subr.bf16.mxu0 0
        %1469 = vmatpush1.bf16.xpose.msra.mxu0 %v1452
        %1470 = vmatprep.subr.bf16.mxu0 0
        %1471 = vmatpush1.bf16.xpose.msra.mxu0 0
        %1472 = vmatprep.subr.bf16.mxu0 0
        %1473 = vmatpush1.bf16.xpose.msra.mxu0 0
        %1474 = vmatprep.subr.bf16.mxu0 0
        %1475 = vmatpush1.bf16.xpose.msra.mxu0 0
        %1476 = vmatprep.subr.bf16.mxu0 0
        %1477 = vmatpush1.bf16.xpose.msra.mxu0 0
        %1478 = vmatprep.subr.bf16.mxu0 0
        %1479 = vmatpush1.bf16.xpose.msra.mxu0 0
        %1480 = vmatprep.subr.bf16.mxu0 0
        %1481 = vmatpush1.bf16.xpose.msra.mxu0 0
        %1482 = vmatprep.subr.bf16.mxu0 0
        %1483 = vmatpush1.bf16.xpose.msra.mxu0 0
        %1484 = vmatprep.subr.bf16.mxu0 0
        %1485 = vmatpush1.bf16.xpose.msra.mxu0 0
        %1486 = vmatprep.mubr.bf16.mxu0 0
        %1487 = vmatmul.mubr.bf16.gmra.mrb[0].mxu0 %v1407
        %v1488 = vpop.f32.mrb[0].mxu0
        %v1489 = vadd.f32 %v1403, %v1488
        %v1490 = vpop.f32.mrb[0].mxu0
        %v1491 = vpop.f32.mrb[0].mxu0
        %v1492 = vadd.f32 %v1403, %v1491
        %v1493 = vpop.f32.mrb[0].mxu0
        %1494 = vmatprep.mubr.bf16.mxu0 0
        %1495 = vmatmul.mubr.bf16.gmra.mrb[0].mxu0 %v1410
        %v1496 = vpop.f32.mrb[0].mxu0
        %v1497 = vadd.f32 %v1403, %v1496
        %v1498 = vpop.f32.mrb[0].mxu0
        %v1499 = vpop.f32.mrb[0].mxu0
        %v1500 = vadd.f32 %v1403, %v1499
        %v1501 = vpop.f32.mrb[0].mxu0
        %1502 = vmatprep.mubr.bf16.mxu0 0
        %1503 = vmatmul.mubr.bf16.gmra.mrb[0].mxu0 %v1413
        %v1504 = vpop.f32.mrb[0].mxu0
        %v1505 = vadd.f32 %v1403, %v1504
        %v1506 = vpop.f32.mrb[0].mxu0
        %v1507 = vpop.f32.mrb[0].mxu0
        %v1508 = vadd.f32 %v1403, %v1507
        %v1509 = vpop.f32.mrb[0].mxu0
        %1510 = vmatprep.mubr.bf16.mxu0 0
        %1511 = vmatmul.mubr.bf16.gmra.mrb[0].mxu0 %v1416
        %v1512 = vpop.f32.mrb[0].mxu0
        %v1513 = vadd.f32 %v1403, %v1512
        %v1514 = vpop.f32.mrb[0].mxu0
        %v1515 = vpop.f32.mrb[0].mxu0
        %v1516 = vadd.f32 %v1403, %v1515
        %v1517 = vpop.f32.mrb[0].mxu0
        %1518 = vmatprep.mubr.bf16.mxu0 0
        %1519 = vmatmul.mubr.bf16.gmra.mrb[0].mxu0 %v1419
        %v1520 = vpop.f32.mrb[0].mxu0
        %v1521 = vadd.f32 %v1403, %v1520
        %v1522 = vpop.f32.mrb[0].mxu0
        %v1523 = vpop.f32.mrb[0].mxu0
        %v1524 = vadd.f32 %v1403, %v1523
        %v1525 = vpop.f32.mrb[0].mxu0
        %1526 = vmatprep.mubr.bf16.mxu0 0
        %1527 = vmatmul.mubr.bf16.gmra.mrb[0].mxu0 %v1422
        %v1528 = vpop.f32.mrb[0].mxu0
        %v1529 = vadd.f32 %v1403, %v1528
        %v1530 = vpop.f32.mrb[0].mxu0
        %v1531 = vpop.f32.mrb[0].mxu0
        %v1532 = vadd.f32 %v1403, %v1531
        %v1533 = vpop.f32.mrb[0].mxu0
        %1534 = vmatprep.mubr.bf16.mxu0 0
        %1535 = vmatmul.mubr.bf16.gmra.mrb[0].mxu0 %v1425
        %v1536 = vpop.f32.mrb[0].mxu0
        %v1537 = vadd.f32 %v1403, %v1536
        %v1538 = vpop.f32.mrb[0].mxu0
        %v1539 = vpop.f32.mrb[0].mxu0
        %v1540 = vadd.f32 %v1403, %v1539
        %v1541 = vpop.f32.mrb[0].mxu0
        %1542 = vmatprep.mubr.bf16.mxu0 0
        %1543 = vmatmul.mubr.bf16.gmra.mrb[0].mxu0 %v1428
        %v1544 = vpop.f32.mrb[0].mxu0
        %v1545 = vadd.f32 %v1403, %v1544
        %v1546 = vpop.f32.mrb[0].mxu0
        %v1547 = vpop.f32.mrb[0].mxu0
        %v1548 = vadd.f32 %v1403, %v1547
        %v1549 = vpop.f32.mrb[0].mxu0
        %1550 = vdwg.mxu0
        %1551 = vmax.xlane.f32.xlu0 %v1489
        %v1552 = vpop.xlane.xlu0 %1551
        %1553 = vmax.xlane.f32.xlu0 %v1492
        %v1554 = vpop.xlane.xlu0 %1553
        %1555 = vmax.xlane.f32.xlu0 %v1497
        %v1556 = vpop.xlane.xlu0 %1555
        %1557 = vmax.xlane.f32.xlu0 %v1500
        %v1558 = vpop.xlane.xlu0 %1557
        %1559 = vmax.xlane.f32.xlu0 %v1505
        %v1560 = vpop.xlane.xlu0 %1559
        %1561 = vmax.xlane.f32.xlu0 %v1508
        %v1562 = vpop.xlane.xlu0 %1561
        %1563 = vmax.xlane.f32.xlu0 %v1513
        %v1564 = vpop.xlane.xlu0 %1563
        %1565 = vmax.xlane.f32.xlu0 %v1516
        %v1566 = vpop.xlane.xlu0 %1565
        %1567 = vmax.xlane.f32.xlu0 %v1521
        %v1568 = vpop.xlane.xlu0 %1567
        %1569 = vmax.xlane.f32.xlu0 %v1524
        %v1570 = vpop.xlane.xlu0 %1569
        %1571 = vmax.xlane.f32.xlu0 %v1529
        %v1572 = vpop.xlane.xlu0 %1571
        %1573 = vmax.xlane.f32.xlu0 %v1532
        %v1574 = vpop.xlane.xlu0 %1573
        %1575 = vmax.xlane.f32.xlu0 %v1537
        %v1576 = vpop.xlane.xlu0 %1575
        %1577 = vmax.xlane.f32.xlu0 %v1540
        %v1578 = vpop.xlane.xlu0 %1577
        %1579 = vmax.xlane.f32.xlu0 %v1545
        %v1580 = vpop.xlane.xlu0 %1579
        %1581 = vmax.xlane.f32.xlu0 %v1548
        %v1582 = vpop.xlane.xlu0 %1581
        %v1583 = vsub.f32 %v1489, %v1552
        %v1584 = vsub.f32 %v1492, %v1554
        %v1585 = vsub.f32 %v1497, %v1556
        %v1586 = vsub.f32 %v1500, %v1558
        %v1587 = vsub.f32 %v1505, %v1560
        %v1588 = vsub.f32 %v1508, %v1562
        %v1589 = vsub.f32 %v1513, %v1564
        %v1590 = vsub.f32 %v1516, %v1566
        %v1591 = vsub.f32 %v1521, %v1568
        %v1592 = vsub.f32 %v1524, %v1570
        %v1593 = vsub.f32 %v1529, %v1572
        %v1594 = vsub.f32 %v1532, %v1574
        %v1595 = vsub.f32 %v1537, %v1576
        %v1596 = vsub.f32 %v1540, %v1578
        %v1597 = vsub.f32 %v1545, %v1580
        %v1598 = vsub.f32 %v1548, %v1582
        %v1599 = vmul.f32 %v1583, 1.442695
        %v1600 = vpow.pop %v1599
        %v1601 = vmul.f32 %v1584, 1.442695
        %v1602 = vpow.pop %v1601
        %v1603 = vmul.f32 %v1585, 1.442695
        %v1604 = vpow.pop %v1603
        %v1605 = vmul.f32 %v1586, 1.442695
        %v1606 = vpow.pop %v1605
        %v1607 = vmul.f32 %v1587, 1.442695
        %v1608 = vpow.pop %v1607
        %v1609 = vmul.f32 %v1588, 1.442695
        %v1610 = vpow.pop %v1609
        %v1611 = vmul.f32 %v1589, 1.442695
        %v1612 = vpow.pop %v1611
        %v1613 = vmul.f32 %v1590, 1.442695
        %v1614 = vpow.pop %v1613
        %v1615 = vmul.f32 %v1591, 1.442695
        %v1616 = vpow.pop %v1615
        %v1617 = vmul.f32 %v1592, 1.442695
        %v1618 = vpow.pop %v1617
        %v1619 = vmul.f32 %v1593, 1.442695
        %v1620 = vpow.pop %v1619
        %v1621 = vmul.f32 %v1594, 1.442695
        %v1622 = vpow.pop %v1621
        %v1623 = vmul.f32 %v1595, 1.442695
        %v1624 = vpow.pop %v1623
        %v1625 = vmul.f32 %v1596, 1.442695
        %v1626 = vpow.pop %v1625
        %v1627 = vmul.f32 %v1597, 1.442695
        %v1628 = vpow.pop %v1627
        %v1629 = vmul.f32 %v1598, 1.442695
        %v1630 = vpow.pop %v1629
        %1631 = vadd.xlane.f32.xlu0 %v1600
        %v1632 = vpop.xlane.xlu0 %1631
        %1633 = vadd.xlane.f32.xlu0 %v1602
        %v1634 = vpop.xlane.xlu0 %1633
        %1635 = vadd.xlane.f32.xlu0 %v1604
        %v1636 = vpop.xlane.xlu0 %1635
        %1637 = vadd.xlane.f32.xlu0 %v1606
        %v1638 = vpop.xlane.xlu0 %1637
        %1639 = vadd.xlane.f32.xlu0 %v1608
        %v1640 = vpop.xlane.xlu0 %1639
        %1641 = vadd.xlane.f32.xlu0 %v1610
        %v1642 = vpop.xlane.xlu0 %1641
        %1643 = vadd.xlane.f32.xlu0 %v1612
        %v1644 = vpop.xlane.xlu0 %1643
        %1645 = vadd.xlane.f32.xlu0 %v1614
        %v1646 = vpop.xlane.xlu0 %1645
        %1647 = vadd.xlane.f32.xlu0 %v1616
        %v1648 = vpop.xlane.xlu0 %1647
        %1649 = vadd.xlane.f32.xlu0 %v1618
        %v1650 = vpop.xlane.xlu0 %1649
        %1651 = vadd.xlane.f32.xlu0 %v1620
        %v1652 = vpop.xlane.xlu0 %1651
        %1653 = vadd.xlane.f32.xlu0 %v1622
        %v1654 = vpop.xlane.xlu0 %1653
        %1655 = vadd.xlane.f32.xlu0 %v1624
        %v1656 = vpop.xlane.xlu0 %1655
        %1657 = vadd.xlane.f32.xlu0 %v1626
        %v1658 = vpop.xlane.xlu0 %1657
        %1659 = vadd.xlane.f32.xlu0 %v1628
        %v1660 = vpop.xlane.xlu0 %1659
        %1661 = vadd.xlane.f32.xlu0 %v1630
        %v1662 = vpop.xlane.xlu0 %1661
        %v1663 = vpack.c.bf16 %v1602, %v1600
        %v1664 = vpack.c.bf16 %v1606, %v1604
        %v1665 = vpack.c.bf16 %v1610, %v1608
        %v1666 = vpack.c.bf16 %v1614, %v1612
        %v1667 = vpack.c.bf16 %v1618, %v1616
        %v1668 = vpack.c.bf16 %v1622, %v1620
        %v1669 = vpack.c.bf16 %v1626, %v1624
        %v1670 = vpack.c.bf16 %v1630, %v1628
        %1671 = vmatprep.subr.bf16.mxu0 0
        %1672 = vmatpush1.bf16.msra.mxu0 %v1390
        %1673 = vmatprep.subr.bf16.mxu0 0
        %1674 = vmatpush1.bf16.msra.mxu0 %v1391
        %1675 = vmatprep.subr.bf16.mxu0 0
        %1676 = vmatpush1.bf16.msra.mxu0 %v1392
        %1677 = vmatprep.subr.bf16.mxu0 0
        %1678 = vmatpush1.bf16.msra.mxu0 %v1393
        %1679 = vmatprep.subr.bf16.mxu0 0
        %1680 = vmatpush1.bf16.msra.mxu0 %v1394
        %1681 = vmatprep.subr.bf16.mxu0 0
        %1682 = vmatpush1.bf16.msra.mxu0 %v1395
        %1683 = vmatprep.subr.bf16.mxu0 0
        %1684 = vmatpush1.bf16.msra.mxu0 %v1396
        %1685 = vmatprep.subr.bf16.mxu0 0
        %1686 = vmatpush1.bf16.msra.mxu0 %v1397
        %1687 = vmatprep.subr.bf16.mxu0 0
        %1688 = vmatpush1.bf16.msra.mxu0 0
        %1689 = vmatprep.subr.bf16.mxu0 0
        %1690 = vmatpush1.bf16.msra.mxu0 0
        %1691 = vmatprep.subr.bf16.mxu0 0
        %1692 = vmatpush1.bf16.msra.mxu0 0
        %1693 = vmatprep.subr.bf16.mxu0 0
        %1694 = vmatpush1.bf16.msra.mxu0 0
        %1695 = vmatprep.subr.bf16.mxu0 0
        %1696 = vmatpush1.bf16.msra.mxu0 0
        %1697 = vmatprep.subr.bf16.mxu0 0
        %1698 = vmatpush1.bf16.msra.mxu0 0
        %1699 = vmatprep.subr.bf16.mxu0 0
        %1700 = vmatpush1.bf16.msra.mxu0 0
        %1701 = vmatprep.subr.bf16.mxu0 0
        %1702 = vmatpush1.bf16.msra.mxu0 0
        %1703 = vmatprep.mubr.bf16.mxu0 0
        %1704 = vmatmul.mubr.bf16.gmra.mrb[0].mxu0 %v1663
        %v1705 = vpop.f32.mrb[0].mxu0
        %v1706 = vadd.f32 0.0, %v1705
        %v1707 = vpop.f32.mrb[0].mxu0
        %v1708 = vpop.f32.mrb[0].mxu0
        %v1709 = vadd.f32 0.0, %v1708
        %v1710 = vpop.f32.mrb[0].mxu0
        %1711 = vmatprep.mubr.bf16.mxu0 0
        %1712 = vmatmul.mubr.bf16.gmra.mrb[0].mxu0 %v1664
        %v1713 = vpop.f32.mrb[0].mxu0
        %v1714 = vadd.f32 0.0, %v1713
        %v1715 = vpop.f32.mrb[0].mxu0
        %v1716 = vpop.f32.mrb[0].mxu0
        %v1717 = vadd.f32 0.0, %v1716
        %v1718 = vpop.f32.mrb[0].mxu0
        %1719 = vmatprep.mubr.bf16.mxu0 0
        %1720 = vmatmul.mubr.bf16.gmra.mrb[0].mxu0 %v1665
        %v1721 = vpop.f32.mrb[0].mxu0
        %v1722 = vadd.f32 0.0, %v1721
        %v1723 = vpop.f32.mrb[0].mxu0
        %v1724 = vpop.f32.mrb[0].mxu0
        %v1725 = vadd.f32 0.0, %v1724
        %v1726 = vpop.f32.mrb[0].mxu0
        %1727 = vmatprep.mubr.bf16.mxu0 0
        %1728 = vmatmul.mubr.bf16.gmra.mrb[0].mxu0 %v1666
        %v1729 = vpop.f32.mrb[0].mxu0
        %v1730 = vadd.f32 0.0, %v1729
        %v1731 = vpop.f32.mrb[0].mxu0
        %v1732 = vpop.f32.mrb[0].mxu0
        %v1733 = vadd.f32 0.0, %v1732
        %v1734 = vpop.f32.mrb[0].mxu0
        %1735 = vmatprep.mubr.bf16.mxu0 0
        %1736 = vmatmul.mubr.bf16.gmra.mrb[0].mxu0 %v1667
        %v1737 = vpop.f32.mrb[0].mxu0
        %v1738 = vadd.f32 0.0, %v1737
        %v1739 = vpop.f32.mrb[0].mxu0
        %v1740 = vpop.f32.mrb[0].mxu0
        %v1741 = vadd.f32 0.0, %v1740
        %v1742 = vpop.f32.mrb[0].mxu0
        %1743 = vmatprep.mubr.bf16.mxu0 0
        %1744 = vmatmul.mubr.bf16.gmra.mrb[0].mxu0 %v1668
        %v1745 = vpop.f32.mrb[0].mxu0
        %v1746 = vadd.f32 0.0, %v1745
        %v1747 = vpop.f32.mrb[0].mxu0
        %v1748 = vpop.f32.mrb[0].mxu0
        %v1749 = vadd.f32 0.0, %v1748
        %v1750 = vpop.f32.mrb[0].mxu0
        %1751 = vmatprep.mubr.bf16.mxu0 0
        %1752 = vmatmul.mubr.bf16.gmra.mrb[0].mxu0 %v1669
        %v1753 = vpop.f32.mrb[0].mxu0
        %v1754 = vadd.f32 0.0, %v1753
        %v1755 = vpop.f32.mrb[0].mxu0
        %v1756 = vpop.f32.mrb[0].mxu0
        %v1757 = vadd.f32 0.0, %v1756
        %v1758 = vpop.f32.mrb[0].mxu0
        %1759 = vmatprep.mubr.bf16.mxu0 0
        %1760 = vmatmul.mubr.bf16.gmra.mrb[0].mxu0 %v1670
        %v1761 = vpop.f32.mrb[0].mxu0
        %v1762 = vadd.f32 0.0, %v1761
        %v1763 = vpop.f32.mrb[0].mxu0
        %v1764 = vpop.f32.mrb[0].mxu0
        %v1765 = vadd.f32 0.0, %v1764
        %v1766 = vpop.f32.mrb[0].mxu0
        %1767 = vdwg.mxu0
        %v1768 = vrcp.pop %v1632
        %v1769 = vrcp.pop %v1634
        %v1770 = vrcp.pop %v1636
        %v1771 = vrcp.pop %v1638
        %v1772 = vrcp.pop %v1640
        %v1773 = vrcp.pop %v1642
        %v1774 = vrcp.pop %v1644
        %v1775 = vrcp.pop %v1646
        %v1776 = vrcp.pop %v1648
        %v1777 = vrcp.pop %v1650
        %v1778 = vrcp.pop %v1652
        %v1779 = vrcp.pop %v1654
        %v1780 = vrcp.pop %v1656
        %v1781 = vrcp.pop %v1658
        %v1782 = vrcp.pop %v1660
        %v1783 = vrcp.pop %v1662
        %v1784 = vmul.f32 %v1706, %v1768
        %v1785 = vmul.f32 %v1709, %v1769
        %v1786 = vmul.f32 %v1714, %v1770
        %v1787 = vmul.f32 %v1717, %v1771
        %v1788 = vmul.f32 %v1722, %v1772
        %v1789 = vmul.f32 %v1725, %v1773
        %v1790 = vmul.f32 %v1730, %v1774
        %v1791 = vmul.f32 %v1733, %v1775
        %v1792 = vmul.f32 %v1738, %v1776
        %v1793 = vmul.f32 %v1741, %v1777
        %v1794 = vmul.f32 %v1746, %v1778
        %v1795 = vmul.f32 %v1749, %v1779
        %v1796 = vmul.f32 %v1754, %v1780
        %v1797 = vmul.f32 %v1757, %v1781
        %v1798 = vmul.f32 %v1762, %v1782
        %v1799 = vmul.f32 %v1765, %v1783
        %v1800 = vpack.c.bf16 %v1785, %v1784
        %v1801 = vpack.c.bf16 %v1787, %v1786
        %v1802 = vpack.c.bf16 %v1789, %v1788
        %v1803 = vpack.c.bf16 %v1791, %v1790
        %v1804 = vpack.c.bf16 %v1793, %v1792
        %v1805 = vpack.c.bf16 %v1795, %v1794
        %v1806 = vpack.c.bf16 %v1797, %v1796
        %v1807 = vpack.c.bf16 %v1799, %v1798
        %1816 = vrot.lane.b32.xlu0 %v1374, 64
        %v1817 = vpop.permute.xlu0 %1816
        %1818 = vrot.lane.b32.xlu0 %v1375, 64
        %v1819 = vpop.permute.xlu0 %1818
        %1820 = vrot.lane.b32.xlu0 %v1376, 64
        %v1821 = vpop.permute.xlu0 %1820
        %1822 = vrot.lane.b32.xlu0 %v1377, 64
        %v1823 = vpop.permute.xlu0 %1822
        %1824 = vrot.lane.b32.xlu0 %v1378, 64
        %v1825 = vpop.permute.xlu0 %1824
        %1826 = vrot.lane.b32.xlu0 %v1379, 64
        %v1827 = vpop.permute.xlu0 %1826
        %1828 = vrot.lane.b32.xlu0 %v1380, 64
        %v1829 = vpop.permute.xlu0 %1828
        %1830 = vrot.lane.b32.xlu0 %v1381, 64
        %v1831 = vpop.permute.xlu0 %1830
        %1840 = vrot.lane.b32.xlu0 %v1382, 64
        %v1841 = vpop.permute.xlu0 %1840
        %1842 = vrot.lane.b32.xlu0 %v1383, 64
        %v1843 = vpop.permute.xlu0 %1842
        %1844 = vrot.lane.b32.xlu0 %v1384, 64
        %v1845 = vpop.permute.xlu0 %1844
        %1846 = vrot.lane.b32.xlu0 %v1385, 64
        %v1847 = vpop.permute.xlu0 %1846
        %1848 = vrot.lane.b32.xlu0 %v1386, 64
        %v1849 = vpop.permute.xlu0 %1848
        %1850 = vrot.lane.b32.xlu0 %v1387, 64
        %v1851 = vpop.permute.xlu0 %1850
        %1852 = vrot.lane.b32.xlu0 %v1388, 64
        %v1853 = vpop.permute.xlu0 %1852
        %1854 = vrot.lane.b32.xlu0 %v1389, 64
        %v1855 = vpop.permute.xlu0 %1854
        %v1857 = vsel %vm1405, %v1817, 0
        %v1860 = vsel %vm1405, %v1819, 0
        %v1863 = vsel %vm1405, %v1821, 0
        %v1866 = vsel %vm1405, %v1823, 0
        %v1869 = vsel %vm1405, %v1825, 0
        %v1872 = vsel %vm1405, %v1827, 0
        %v1875 = vsel %vm1405, %v1829, 0
        %v1878 = vsel %vm1405, %v1831, 0
        %v1881 = vsel %vm1405, %v1841, 0
        %v1884 = vsel %vm1405, %v1843, 0
        %v1887 = vsel %vm1405, %v1845, 0
        %v1890 = vsel %vm1405, %v1847, 0
        %v1893 = vsel %vm1405, %v1849, 0
        %v1896 = vsel %vm1405, %v1851, 0
        %v1899 = vsel %vm1405, %v1853, 0
        %v1902 = vsel %vm1405, %v1855, 0
        %1904 = vmatprep.subr.bf16.mxu0 0
        %1905 = vmatpush1.bf16.xpose.msra.mxu0 %v1881
        %1906 = vmatprep.subr.bf16.mxu0 0
        %1907 = vmatpush1.bf16.xpose.msra.mxu0 %v1884
        %1908 = vmatprep.subr.bf16.mxu0 0
        %1909 = vmatpush1.bf16.xpose.msra.mxu0 %v1887
        %1910 = vmatprep.subr.bf16.mxu0 0
        %1911 = vmatpush1.bf16.xpose.msra.mxu0 %v1890
        %1912 = vmatprep.subr.bf16.mxu0 0
        %1913 = vmatpush1.bf16.xpose.msra.mxu0 %v1893
        %1914 = vmatprep.subr.bf16.mxu0 0
        %1915 = vmatpush1.bf16.xpose.msra.mxu0 %v1896
        %1916 = vmatprep.subr.bf16.mxu0 0
        %1917 = vmatpush1.bf16.xpose.msra.mxu0 %v1899
        %1918 = vmatprep.subr.bf16.mxu0 0
        %1919 = vmatpush1.bf16.xpose.msra.mxu0 %v1902
        %1920 = vmatprep.subr.bf16.mxu0 0
        %1921 = vmatpush1.bf16.xpose.msra.mxu0 0
        %1922 = vmatprep.subr.bf16.mxu0 0
        %1923 = vmatpush1.bf16.xpose.msra.mxu0 0
        %1924 = vmatprep.subr.bf16.mxu0 0
        %1925 = vmatpush1.bf16.xpose.msra.mxu0 0
        %1926 = vmatprep.subr.bf16.mxu0 0
        %1927 = vmatpush1.bf16.xpose.msra.mxu0 0
        %1928 = vmatprep.subr.bf16.mxu0 0
        %1929 = vmatpush1.bf16.xpose.msra.mxu0 0
        %1930 = vmatprep.subr.bf16.mxu0 0
        %1931 = vmatpush1.bf16.xpose.msra.mxu0 0
        %1932 = vmatprep.subr.bf16.mxu0 0
        %1933 = vmatpush1.bf16.xpose.msra.mxu0 0
        %1934 = vmatprep.subr.bf16.mxu0 0
        %1935 = vmatpush1.bf16.xpose.msra.mxu0 0
        %1936 = vmatprep.mubr.bf16.mxu0 0
        %1937 = vmatmul.mubr.bf16.gmra.mrb[0].mxu0 %v1857
        %v1938 = vpop.f32.mrb[0].mxu0
        %v1939 = vadd.f32 %v1403, %v1938
        %v1940 = vpop.f32.mrb[0].mxu0
        %v1941 = vpop.f32.mrb[0].mxu0
        %v1942 = vadd.f32 %v1403, %v1941
        %v1943 = vpop.f32.mrb[0].mxu0
        %1944 = vmatprep.mubr.bf16.mxu0 0
        %1945 = vmatmul.mubr.bf16.gmra.mrb[0].mxu0 %v1860
        %v1946 = vpop.f32.mrb[0].mxu0
        %v1947 = vadd.f32 %v1403, %v1946
        %v1948 = vpop.f32.mrb[0].mxu0
        %v1949 = vpop.f32.mrb[0].mxu0
        %v1950 = vadd.f32 %v1403, %v1949
        %v1951 = vpop.f32.mrb[0].mxu0
        %1952 = vmatprep.mubr.bf16.mxu0 0
        %1953 = vmatmul.mubr.bf16.gmra.mrb[0].mxu0 %v1863
        %v1954 = vpop.f32.mrb[0].mxu0
        %v1955 = vadd.f32 %v1403, %v1954
        %v1956 = vpop.f32.mrb[0].mxu0
        %v1957 = vpop.f32.mrb[0].mxu0
        %v1958 = vadd.f32 %v1403, %v1957
        %v1959 = vpop.f32.mrb[0].mxu0
        %1960 = vmatprep.mubr.bf16.mxu0 0
        %1961 = vmatmul.mubr.bf16.gmra.mrb[0].mxu0 %v1866
        %v1962 = vpop.f32.mrb[0].mxu0
        %v1963 = vadd.f32 %v1403, %v1962
        %v1964 = vpop.f32.mrb[0].mxu0
        %v1965 = vpop.f32.mrb[0].mxu0
        %v1966 = vadd.f32 %v1403, %v1965
        %v1967 = vpop.f32.mrb[0].mxu0
        %1968 = vmatprep.mubr.bf16.mxu0 0
        %1969 = vmatmul.mubr.bf16.gmra.mrb[0].mxu0 %v1869
        %v1970 = vpop.f32.mrb[0].mxu0
        %v1971 = vadd.f32 %v1403, %v1970
        %v1972 = vpop.f32.mrb[0].mxu0
        %v1973 = vpop.f32.mrb[0].mxu0
        %v1974 = vadd.f32 %v1403, %v1973
        %v1975 = vpop.f32.mrb[0].mxu0
        %1976 = vmatprep.mubr.bf16.mxu0 0
        %1977 = vmatmul.mubr.bf16.gmra.mrb[0].mxu0 %v1872
        %v1978 = vpop.f32.mrb[0].mxu0
        %v1979 = vadd.f32 %v1403, %v1978
        %v1980 = vpop.f32.mrb[0].mxu0
        %v1981 = vpop.f32.mrb[0].mxu0
        %v1982 = vadd.f32 %v1403, %v1981
        %v1983 = vpop.f32.mrb[0].mxu0
        %1984 = vmatprep.mubr.bf16.mxu0 0
        %1985 = vmatmul.mubr.bf16.gmra.mrb[0].mxu0 %v1875
        %v1986 = vpop.f32.mrb[0].mxu0
        %v1987 = vadd.f32 %v1403, %v1986
        %v1988 = vpop.f32.mrb[0].mxu0
        %v1989 = vpop.f32.mrb[0].mxu0
        %v1990 = vadd.f32 %v1403, %v1989
        %v1991 = vpop.f32.mrb[0].mxu0
        %1992 = vmatprep.mubr.bf16.mxu0 0
        %1993 = vmatmul.mubr.bf16.gmra.mrb[0].mxu0 %v1878
        %v1994 = vpop.f32.mrb[0].mxu0
        %v1995 = vadd.f32 %v1403, %v1994
        %v1996 = vpop.f32.mrb[0].mxu0
        %v1997 = vpop.f32.mrb[0].mxu0
        %v1998 = vadd.f32 %v1403, %v1997
        %v1999 = vpop.f32.mrb[0].mxu0
        %2000 = vdwg.mxu0
        %2001 = vmax.xlane.f32.xlu0 %v1939
        %v2002 = vpop.xlane.xlu0 %2001
        %2003 = vmax.xlane.f32.xlu0 %v1942
        %v2004 = vpop.xlane.xlu0 %2003
        %2005 = vmax.xlane.f32.xlu0 %v1947
        %v2006 = vpop.xlane.xlu0 %2005
        %2007 = vmax.xlane.f32.xlu0 %v1950
        %v2008 = vpop.xlane.xlu0 %2007
        %2009 = vmax.xlane.f32.xlu0 %v1955
        %v2010 = vpop.xlane.xlu0 %2009
        %2011 = vmax.xlane.f32.xlu0 %v1958
        %v2012 = vpop.xlane.xlu0 %2011
        %2013 = vmax.xlane.f32.xlu0 %v1963
        %v2014 = vpop.xlane.xlu0 %2013
        %2015 = vmax.xlane.f32.xlu0 %v1966
        %v2016 = vpop.xlane.xlu0 %2015
        %2017 = vmax.xlane.f32.xlu0 %v1971
        %v2018 = vpop.xlane.xlu0 %2017
        %2019 = vmax.xlane.f32.xlu0 %v1974
        %v2020 = vpop.xlane.xlu0 %2019
        %2021 = vmax.xlane.f32.xlu0 %v1979
        %v2022 = vpop.xlane.xlu0 %2021
        %2023 = vmax.xlane.f32.xlu0 %v1982
        %v2024 = vpop.xlane.xlu0 %2023
        %2025 = vmax.xlane.f32.xlu0 %v1987
        %v2026 = vpop.xlane.xlu0 %2025
        %2027 = vmax.xlane.f32.xlu0 %v1990
        %v2028 = vpop.xlane.xlu0 %2027
        %2029 = vmax.xlane.f32.xlu0 %v1995
        %v2030 = vpop.xlane.xlu0 %2029
        %2031 = vmax.xlane.f32.xlu0 %v1998
        %v2032 = vpop.xlane.xlu0 %2031
        %v2033 = vsub.f32 %v1939, %v2002
        %v2034 = vsub.f32 %v1942, %v2004
        %v2035 = vsub.f32 %v1947, %v2006
        %v2036 = vsub.f32 %v1950, %v2008
        %v2037 = vsub.f32 %v1955, %v2010
        %v2038 = vsub.f32 %v1958, %v2012
        %v2039 = vsub.f32 %v1963, %v2014
        %v2040 = vsub.f32 %v1966, %v2016
        %v2041 = vsub.f32 %v1971, %v2018
        %v2042 = vsub.f32 %v1974, %v2020
        %v2043 = vsub.f32 %v1979, %v2022
        %v2044 = vsub.f32 %v1982, %v2024
        %v2045 = vsub.f32 %v1987, %v2026
        %v2046 = vsub.f32 %v1990, %v2028
        %v2047 = vsub.f32 %v1995, %v2030
        %v2048 = vsub.f32 %v1998, %v2032
        %v2049 = vmul.f32 %v2033, 1.442695
        %v2050 = vpow.pop %v2049
        %v2051 = vmul.f32 %v2034, 1.442695
        %v2052 = vpow.pop %v2051
        %v2053 = vmul.f32 %v2035, 1.442695
        %v2054 = vpow.pop %v2053
        %v2055 = vmul.f32 %v2036, 1.442695
        %v2056 = vpow.pop %v2055
        %v2057 = vmul.f32 %v2037, 1.442695
        %v2058 = vpow.pop %v2057
        %v2059 = vmul.f32 %v2038, 1.442695
        %v2060 = vpow.pop %v2059
        %v2061 = vmul.f32 %v2039, 1.442695
        %v2062 = vpow.pop %v2061
        %v2063 = vmul.f32 %v2040, 1.442695
        %v2064 = vpow.pop %v2063
        %v2065 = vmul.f32 %v2041, 1.442695
        %v2066 = vpow.pop %v2065
        %v2067 = vmul.f32 %v2042, 1.442695
        %v2068 = vpow.pop %v2067
        %v2069 = vmul.f32 %v2043, 1.442695
        %v2070 = vpow.pop %v2069
        %v2071 = vmul.f32 %v2044, 1.442695
        %v2072 = vpow.pop %v2071
        %v2073 = vmul.f32 %v2045, 1.442695
        %v2074 = vpow.pop %v2073
        %v2075 = vmul.f32 %v2046, 1.442695
        %v2076 = vpow.pop %v2075
        %v2077 = vmul.f32 %v2047, 1.442695
        %v2078 = vpow.pop %v2077
        %v2079 = vmul.f32 %v2048, 1.442695
        %v2080 = vpow.pop %v2079
        %2081 = vadd.xlane.f32.xlu0 %v2050
        %v2082 = vpop.xlane.xlu0 %2081
        %2083 = vadd.xlane.f32.xlu0 %v2052
        %v2084 = vpop.xlane.xlu0 %2083
        %2085 = vadd.xlane.f32.xlu0 %v2054
        %v2086 = vpop.xlane.xlu0 %2085
        %2087 = vadd.xlane.f32.xlu0 %v2056
        %v2088 = vpop.xlane.xlu0 %2087
        %2089 = vadd.xlane.f32.xlu0 %v2058
        %v2090 = vpop.xlane.xlu0 %2089
        %2091 = vadd.xlane.f32.xlu0 %v2060
        %v2092 = vpop.xlane.xlu0 %2091
        %2093 = vadd.xlane.f32.xlu0 %v2062
        %v2094 = vpop.xlane.xlu0 %2093
        %2095 = vadd.xlane.f32.xlu0 %v2064
        %v2096 = vpop.xlane.xlu0 %2095
        %2097 = vadd.xlane.f32.xlu0 %v2066
        %v2098 = vpop.xlane.xlu0 %2097
        %2099 = vadd.xlane.f32.xlu0 %v2068
        %v2100 = vpop.xlane.xlu0 %2099
        %2101 = vadd.xlane.f32.xlu0 %v2070
        %v2102 = vpop.xlane.xlu0 %2101
        %2103 = vadd.xlane.f32.xlu0 %v2072
        %v2104 = vpop.xlane.xlu0 %2103
        %2105 = vadd.xlane.f32.xlu0 %v2074
        %v2106 = vpop.xlane.xlu0 %2105
        %2107 = vadd.xlane.f32.xlu0 %v2076
        %v2108 = vpop.xlane.xlu0 %2107
        %2109 = vadd.xlane.f32.xlu0 %v2078
        %v2110 = vpop.xlane.xlu0 %2109
        %2111 = vadd.xlane.f32.xlu0 %v2080
        %v2112 = vpop.xlane.xlu0 %2111
        %v2113 = vpack.c.bf16 %v2052, %v2050
        %v2114 = vpack.c.bf16 %v2056, %v2054
        %v2115 = vpack.c.bf16 %v2060, %v2058
        %v2116 = vpack.c.bf16 %v2064, %v2062
        %v2117 = vpack.c.bf16 %v2068, %v2066
        %v2118 = vpack.c.bf16 %v2072, %v2070
        %v2119 = vpack.c.bf16 %v2076, %v2074
        %v2120 = vpack.c.bf16 %v2080, %v2078
        %2129 = vrot.lane.b32.xlu0 %v1390, 64
        %v2130 = vpop.permute.xlu0 %2129
        %2131 = vrot.lane.b32.xlu0 %v1391, 64
        %v2132 = vpop.permute.xlu0 %2131
        %2133 = vrot.lane.b32.xlu0 %v1392, 64
        %v2134 = vpop.permute.xlu0 %2133
        %2135 = vrot.lane.b32.xlu0 %v1393, 64
        %v2136 = vpop.permute.xlu0 %2135
        %2137 = vrot.lane.b32.xlu0 %v1394, 64
        %v2138 = vpop.permute.xlu0 %2137
        %2139 = vrot.lane.b32.xlu0 %v1395, 64
        %v2140 = vpop.permute.xlu0 %2139
        %2141 = vrot.lane.b32.xlu0 %v1396, 64
        %v2142 = vpop.permute.xlu0 %2141
        %2143 = vrot.lane.b32.xlu0 %v1397, 64
        %v2144 = vpop.permute.xlu0 %2143
        %2153 = vmatprep.subr.bf16.mxu0 0
        %2154 = vmatpush1.bf16.msra.mxu0 %v2130
        %2155 = vmatprep.subr.bf16.mxu0 0
        %2156 = vmatpush1.bf16.msra.mxu0 %v2132
        %2157 = vmatprep.subr.bf16.mxu0 0
        %2158 = vmatpush1.bf16.msra.mxu0 %v2134
        %2159 = vmatprep.subr.bf16.mxu0 0
        %2160 = vmatpush1.bf16.msra.mxu0 %v2136
        %2161 = vmatprep.subr.bf16.mxu0 0
        %2162 = vmatpush1.bf16.msra.mxu0 %v2138
        %2163 = vmatprep.subr.bf16.mxu0 0
        %2164 = vmatpush1.bf16.msra.mxu0 %v2140
        %2165 = vmatprep.subr.bf16.mxu0 0
        %2166 = vmatpush1.bf16.msra.mxu0 %v2142
        %2167 = vmatprep.subr.bf16.mxu0 0
        %2168 = vmatpush1.bf16.msra.mxu0 %v2144
        %2169 = vmatprep.subr.bf16.mxu0 0
        %2170 = vmatpush1.bf16.msra.mxu0 0
        %2171 = vmatprep.subr.bf16.mxu0 0
        %2172 = vmatpush1.bf16.msra.mxu0 0
        %2173 = vmatprep.subr.bf16.mxu0 0
        %2174 = vmatpush1.bf16.msra.mxu0 0
        %2175 = vmatprep.subr.bf16.mxu0 0
        %2176 = vmatpush1.bf16.msra.mxu0 0
        %2177 = vmatprep.subr.bf16.mxu0 0
        %2178 = vmatpush1.bf16.msra.mxu0 0
        %2179 = vmatprep.subr.bf16.mxu0 0
        %2180 = vmatpush1.bf16.msra.mxu0 0
        %2181 = vmatprep.subr.bf16.mxu0 0
        %2182 = vmatpush1.bf16.msra.mxu0 0
        %2183 = vmatprep.subr.bf16.mxu0 0
        %2184 = vmatpush1.bf16.msra.mxu0 0
        %2185 = vmatprep.mubr.bf16.mxu0 0
        %2186 = vmatmul.mubr.bf16.gmra.mrb[0].mxu0 %v2113
        %v2187 = vpop.f32.mrb[0].mxu0
        %v2188 = vadd.f32 0.0, %v2187
        %v2189 = vpop.f32.mrb[0].mxu0
        %v2190 = vpop.f32.mrb[0].mxu0
        %v2191 = vadd.f32 0.0, %v2190
        %v2192 = vpop.f32.mrb[0].mxu0
        %2193 = vmatprep.mubr.bf16.mxu0 0
        %2194 = vmatmul.mubr.bf16.gmra.mrb[0].mxu0 %v2114
        %v2195 = vpop.f32.mrb[0].mxu0
        %v2196 = vadd.f32 0.0, %v2195
        %v2197 = vpop.f32.mrb[0].mxu0
        %v2198 = vpop.f32.mrb[0].mxu0
        %v2199 = vadd.f32 0.0, %v2198
        %v2200 = vpop.f32.mrb[0].mxu0
        %2201 = vmatprep.mubr.bf16.mxu0 0
        %2202 = vmatmul.mubr.bf16.gmra.mrb[0].mxu0 %v2115
        %v2203 = vpop.f32.mrb[0].mxu0
        %v2204 = vadd.f32 0.0, %v2203
        %v2205 = vpop.f32.mrb[0].mxu0
        %v2206 = vpop.f32.mrb[0].mxu0
        %v2207 = vadd.f32 0.0, %v2206
        %v2208 = vpop.f32.mrb[0].mxu0
        %2209 = vmatprep.mubr.bf16.mxu0 0
        %2210 = vmatmul.mubr.bf16.gmra.mrb[0].mxu0 %v2116
        %v2211 = vpop.f32.mrb[0].mxu0
        %v2212 = vadd.f32 0.0, %v2211
        %v2213 = vpop.f32.mrb[0].mxu0
        %v2214 = vpop.f32.mrb[0].mxu0
        %v2215 = vadd.f32 0.0, %v2214
        %v2216 = vpop.f32.mrb[0].mxu0
        %2217 = vmatprep.mubr.bf16.mxu0 0
        %2218 = vmatmul.mubr.bf16.gmra.mrb[0].mxu0 %v2117
        %v2219 = vpop.f32.mrb[0].mxu0
        %v2220 = vadd.f32 0.0, %v2219
        %v2221 = vpop.f32.mrb[0].mxu0
        %v2222 = vpop.f32.mrb[0].mxu0
        %v2223 = vadd.f32 0.0, %v2222
        %v2224 = vpop.f32.mrb[0].mxu0
        %2225 = vmatprep.mubr.bf16.mxu0 0
        %2226 = vmatmul.mubr.bf16.gmra.mrb[0].mxu0 %v2118
        %v2227 = vpop.f32.mrb[0].mxu0
        %v2228 = vadd.f32 0.0, %v2227
        %v2229 = vpop.f32.mrb[0].mxu0
        %v2230 = vpop.f32.mrb[0].mxu0
        %v2231 = vadd.f32 0.0, %v2230
        %v2232 = vpop.f32.mrb[0].mxu0
        %2233 = vmatprep.mubr.bf16.mxu0 0
        %2234 = vmatmul.mubr.bf16.gmra.mrb[0].mxu0 %v2119
        %v2235 = vpop.f32.mrb[0].mxu0
        %v2236 = vadd.f32 0.0, %v2235
        %v2237 = vpop.f32.mrb[0].mxu0
        %v2238 = vpop.f32.mrb[0].mxu0
        %v2239 = vadd.f32 0.0, %v2238
        %v2240 = vpop.f32.mrb[0].mxu0
        %2241 = vmatprep.mubr.bf16.mxu0 0
        %2242 = vmatmul.mubr.bf16.gmra.mrb[0].mxu0 %v2120
        %v2243 = vpop.f32.mrb[0].mxu0
        %v2244 = vadd.f32 0.0, %v2243
        %v2245 = vpop.f32.mrb[0].mxu0
        %v2246 = vpop.f32.mrb[0].mxu0
        %v2247 = vadd.f32 0.0, %v2246
        %v2248 = vpop.f32.mrb[0].mxu0
        %2249 = vdwg.mxu0
        %v2250 = vrcp.pop %v2082
        %v2251 = vrcp.pop %v2084
        %v2252 = vrcp.pop %v2086
        %v2253 = vrcp.pop %v2088
        %v2254 = vrcp.pop %v2090
        %v2255 = vrcp.pop %v2092
        %v2256 = vrcp.pop %v2094
        %v2257 = vrcp.pop %v2096
        %v2258 = vrcp.pop %v2098
        %v2259 = vrcp.pop %v2100
        %v2260 = vrcp.pop %v2102
        %v2261 = vrcp.pop %v2104
        %v2262 = vrcp.pop %v2106
        %v2263 = vrcp.pop %v2108
        %v2264 = vrcp.pop %v2110
        %v2265 = vrcp.pop %v2112
        %v2266 = vmul.f32 %v2188, %v2250
        %v2267 = vmul.f32 %v2191, %v2251
        %v2268 = vmul.f32 %v2196, %v2252
        %v2269 = vmul.f32 %v2199, %v2253
        %v2270 = vmul.f32 %v2204, %v2254
        %v2271 = vmul.f32 %v2207, %v2255
        %v2272 = vmul.f32 %v2212, %v2256
        %v2273 = vmul.f32 %v2215, %v2257
        %v2274 = vmul.f32 %v2220, %v2258
        %v2275 = vmul.f32 %v2223, %v2259
        %v2276 = vmul.f32 %v2228, %v2260
        %v2277 = vmul.f32 %v2231, %v2261
        %v2278 = vmul.f32 %v2236, %v2262
        %v2279 = vmul.f32 %v2239, %v2263
        %v2280 = vmul.f32 %v2244, %v2264
        %v2281 = vmul.f32 %v2247, %v2265
        %v2282 = vpack.c.bf16 %v2267, %v2266
        %v2283 = vpack.c.bf16 %v2269, %v2268
        %v2284 = vpack.c.bf16 %v2271, %v2270
        %v2285 = vpack.c.bf16 %v2273, %v2272
        %v2286 = vpack.c.bf16 %v2275, %v2274
        %v2287 = vpack.c.bf16 %v2277, %v2276
        %v2288 = vpack.c.bf16 %v2279, %v2278
        %v2289 = vpack.c.bf16 %v2281, %v2280
        %2298 = vrot.lane.b32.xlu0 %v2282, 64
        %v2299 = vpop.permute.xlu0 %2298
        %2300 = vrot.lane.b32.xlu0 %v2283, 64
        %v2301 = vpop.permute.xlu0 %2300
        %2302 = vrot.lane.b32.xlu0 %v2284, 64
        %v2303 = vpop.permute.xlu0 %2302
        %2304 = vrot.lane.b32.xlu0 %v2285, 64
        %v2305 = vpop.permute.xlu0 %2304
        %2306 = vrot.lane.b32.xlu0 %v2286, 64
        %v2307 = vpop.permute.xlu0 %2306
        %2308 = vrot.lane.b32.xlu0 %v2287, 64
        %v2309 = vpop.permute.xlu0 %2308
        %2310 = vrot.lane.b32.xlu0 %v2288, 64
        %v2311 = vpop.permute.xlu0 %2310
        %2312 = vrot.lane.b32.xlu0 %v2289, 64
        %v2313 = vpop.permute.xlu0 %2312
        %v2316 = vsel %vm1405, %v1800, %v2299
        %v2320 = vsel %vm1405, %v1801, %v2301
        %v2324 = vsel %vm1405, %v1802, %v2303
        %v2328 = vsel %vm1405, %v1803, %v2305
        %v2332 = vsel %vm1405, %v1804, %v2307
        %v2336 = vsel %vm1405, %v1805, %v2309
        %v2340 = vsel %vm1405, %v1806, %v2311
        %v2344 = vsel %vm1405, %v1807, %v2313
        %s2346 = smul.u32 %s32, 8
        %s2347 = smul.addr %s2346, 8
        %s2348 = scalar_lea.vmem [#allocation3], %s2347
        %2349 = vst [vmem:[%s2348] sm:$0xff] %v2316
        %2350 = vst [vmem:[%s2348 + $0x8] sm:$0xff] %v2320
        %2351 = vst [vmem:[%s2348 + $0x10] sm:$0xff] %v2324
        %2352 = vst [vmem:[%s2348 + $0x18] sm:$0xff] %v2328
        %2353 = vst [vmem:[%s2348 + $0x20] sm:$0xff] %v2332
        %2354 = vst [vmem:[%s2348 + $0x28] sm:$0xff] %v2336
        %2355 = vst [vmem:[%s2348 + $0x30] sm:$0xff] %v2340
        %2356 = vst [vmem:[%s2348 + $0x38] sm:$0xff] %v2344
        %p2357 = scmp.eq.s32.totalorder %s32, 1
        // Predicated region
        $region73: #{tpu_custom_call.1} parent=51 // pred_check
          %p2358 = pneg %p2357
        $region74: #{tpu_custom_call.1} parent=51 // pred_check_branch
          %2360 = sbr.rel (%p2358) target = $region76
        $region75: #{tpu_custom_call.1} parent=51 // pred_region
          %v2361 = vld [vmem:[#allocation3] sm:$0xff]
          %v2362 = vld [vmem:[#allocation3 + $0x8] sm:$0xff]
          %v2363 = vld [vmem:[#allocation3 + $0x10] sm:$0xff]
          %v2364 = vld [vmem:[#allocation3 + $0x18] sm:$0xff]
          %v2365 = vld [vmem:[#allocation3 + $0x20] sm:$0xff]
          %v2366 = vld [vmem:[#allocation3 + $0x28] sm:$0xff]
          %v2367 = vld [vmem:[#allocation3 + $0x30] sm:$0xff]
          %v2368 = vld [vmem:[#allocation3 + $0x38] sm:$0xff]
          %v2369 = vld [vmem:[#allocation10] sm:$0xff]
          %v2370 = vld [vmem:[#allocation10 + $0x8] sm:$0xff]
          %v2371 = vld [vmem:[#allocation10 + $0x10] sm:$0xff]
          %v2372 = vld [vmem:[#allocation10 + $0x18] sm:$0xff]
          %v2373 = vld [vmem:[#allocation10 + $0x20] sm:$0xff]
          %v2374 = vld [vmem:[#allocation10 + $0x28] sm:$0xff]
          %v2375 = vld [vmem:[#allocation10 + $0x30] sm:$0xff]
          %v2376 = vld [vmem:[#allocation10 + $0x38] sm:$0xff]
          %v2377 = vld [vmem:[#allocation10 + $0x40] sm:$0xff]
          %v2378 = vld [vmem:[#allocation10 + $0x48] sm:$0xff]
          %v2379 = vld [vmem:[#allocation10 + $0x50] sm:$0xff]
          %v2380 = vld [vmem:[#allocation10 + $0x58] sm:$0xff]
          %v2381 = vld [vmem:[#allocation10 + $0x60] sm:$0xff]
          %v2382 = vld [vmem:[#allocation10 + $0x68] sm:$0xff]
          %v2383 = vld [vmem:[#allocation10 + $0x70] sm:$0xff]
          %v2384 = vld [vmem:[#allocation10 + $0x78] sm:$0xff]
          %s2385 = scalar_lea.vmem [#allocation3], 64
          %v2386 = vld [vmem:[%s2385] sm:$0xff]
          %v2387 = vld [vmem:[%s2385 + $0x8] sm:$0xff]
          %v2388 = vld [vmem:[%s2385 + $0x10] sm:$0xff]
          %v2389 = vld [vmem:[%s2385 + $0x18] sm:$0xff]
          %v2390 = vld [vmem:[%s2385 + $0x20] sm:$0xff]
          %v2391 = vld [vmem:[%s2385 + $0x28] sm:$0xff]
          %v2392 = vld [vmem:[%s2385 + $0x30] sm:$0xff]
          %v2393 = vld [vmem:[%s2385 + $0x38] sm:$0xff]
          %s2394 = scalar_lea.vmem [#allocation10], 128
          %v2395 = vld [vmem:[%s2394] sm:$0xff]
          %v2396 = vld [vmem:[%s2394 + $0x8] sm:$0xff]
          %v2397 = vld [vmem:[%s2394 + $0x10] sm:$0xff]
          %v2398 = vld [vmem:[%s2394 + $0x18] sm:$0xff]
          %v2399 = vld [vmem:[%s2394 + $0x20] sm:$0xff]
          %v2400 = vld [vmem:[%s2394 + $0x28] sm:$0xff]
          %v2401 = vld [vmem:[%s2394 + $0x30] sm:$0xff]
          %v2402 = vld [vmem:[%s2394 + $0x38] sm:$0xff]
          %v2403 = vld [vmem:[%s2394 + $0x40] sm:$0xff]
          %v2404 = vld [vmem:[%s2394 + $0x48] sm:$0xff]
          %v2405 = vld [vmem:[%s2394 + $0x50] sm:$0xff]
          %v2406 = vld [vmem:[%s2394 + $0x58] sm:$0xff]
          %v2407 = vld [vmem:[%s2394 + $0x60] sm:$0xff]
          %v2408 = vld [vmem:[%s2394 + $0x68] sm:$0xff]
          %v2409 = vld [vmem:[%s2394 + $0x70] sm:$0xff]
          %v2410 = vld [vmem:[%s2394 + $0x78] sm:$0xff]
          %v2427 = vunpack.c.l.b16 %v2395
          %v2428 = vunpack.c.h.b16 %v2395
          %v2429 = vunpack.c.l.b16 %v2396
          %v2430 = vunpack.c.h.b16 %v2396
          %v2431 = vunpack.c.l.b16 %v2397
          %v2432 = vunpack.c.h.b16 %v2397
          %v2433 = vunpack.c.l.b16 %v2398
          %v2434 = vunpack.c.h.b16 %v2398
          %v2435 = vunpack.c.l.b16 %v2399
          %v2436 = vunpack.c.h.b16 %v2399
          %v2437 = vunpack.c.l.b16 %v2400
          %v2438 = vunpack.c.h.b16 %v2400
          %v2439 = vunpack.c.l.b16 %v2401
          %v2440 = vunpack.c.h.b16 %v2401
          %v2441 = vunpack.c.l.b16 %v2402
          %v2442 = vunpack.c.h.b16 %v2402
          %v2443 = vunpack.c.l.b16 %v2403
          %v2444 = vunpack.c.h.b16 %v2403
          %v2445 = vunpack.c.l.b16 %v2404
          %v2446 = vunpack.c.h.b16 %v2404
          %v2447 = vunpack.c.l.b16 %v2405
          %v2448 = vunpack.c.h.b16 %v2405
          %v2449 = vunpack.c.l.b16 %v2406
          %v2450 = vunpack.c.h.b16 %v2406
          %v2451 = vunpack.c.l.b16 %v2407
          %v2452 = vunpack.c.h.b16 %v2407
          %v2453 = vunpack.c.l.b16 %v2408
          %v2454 = vunpack.c.h.b16 %v2408
          %v2455 = vunpack.c.l.b16 %v2409
          %v2456 = vunpack.c.h.b16 %v2409
          %v2457 = vunpack.c.l.b16 %v2410
          %v2458 = vunpack.c.h.b16 %v2410
          %v2459 = vpack.c.b16 %v2429, %v2427
          %v2460 = vpack.c.b16 %v2430, %v2428
          %v2461 = vpack.c.b16 %v2433, %v2431
          %v2462 = vpack.c.b16 %v2434, %v2432
          %v2463 = vpack.c.b16 %v2437, %v2435
          %v2464 = vpack.c.b16 %v2438, %v2436
          %v2465 = vpack.c.b16 %v2441, %v2439
          %v2466 = vpack.c.b16 %v2442, %v2440
          %v2467 = vpack.c.b16 %v2445, %v2443
          %v2468 = vpack.c.b16 %v2446, %v2444
          %v2469 = vpack.c.b16 %v2449, %v2447
          %v2470 = vpack.c.b16 %v2450, %v2448
          %v2471 = vpack.c.b16 %v2453, %v2451
          %v2472 = vpack.c.b16 %v2454, %v2452
          %v2473 = vpack.c.b16 %v2457, %v2455
          %v2474 = vpack.c.b16 %v2458, %v2456
          %2491 = vmatprep.subr.bf16.mxu0 %v2460
          %2492 = vmatpush1.bf16.msra.mxu0 %v2459
          %2493 = vmatprep.subr.bf16.mxu0 %v2462
          %2494 = vmatpush1.bf16.msra.mxu0 %v2461
          %2495 = vmatprep.subr.bf16.mxu0 %v2464
          %2496 = vmatpush1.bf16.msra.mxu0 %v2463
          %2497 = vmatprep.subr.bf16.mxu0 %v2466
          %2498 = vmatpush1.bf16.msra.mxu0 %v2465
          %2499 = vmatprep.subr.bf16.mxu0 %v2468
          %2500 = vmatpush1.bf16.msra.mxu0 %v2467
          %2501 = vmatprep.subr.bf16.mxu0 %v2470
          %2502 = vmatpush1.bf16.msra.mxu0 %v2469
          %2503 = vmatprep.subr.bf16.mxu0 %v2472
          %2504 = vmatpush1.bf16.msra.mxu0 %v2471
          %2505 = vmatprep.subr.bf16.mxu0 %v2474
          %2506 = vmatpush1.bf16.msra.mxu0 %v2473
          %2507 = vmatprep.subr.bf16.mxu0 0
          %2508 = vmatpush1.bf16.msra.mxu0 0
          %2509 = vmatprep.subr.bf16.mxu0 0
          %2510 = vmatpush1.bf16.msra.mxu0 0
          %2511 = vmatprep.subr.bf16.mxu0 0
          %2512 = vmatpush1.bf16.msra.mxu0 0
          %2513 = vmatprep.subr.bf16.mxu0 0
          %2514 = vmatpush1.bf16.msra.mxu0 0
          %2515 = vmatprep.subr.bf16.mxu0 0
          %2516 = vmatpush1.bf16.msra.mxu0 0
          %2517 = vmatprep.subr.bf16.mxu0 0
          %2518 = vmatpush1.bf16.msra.mxu0 0
          %2519 = vmatprep.subr.bf16.mxu0 0
          %2520 = vmatpush1.bf16.msra.mxu0 0
          %2521 = vmatprep.subr.bf16.mxu0 0
          %2522 = vmatpush1.bf16.msra.mxu0 0
          %2523 = vmatprep.mubr.bf16.mxu0 0
          %2524 = vmatmul.mubr.bf16.gmra.mrb[0].mxu0 %v2386
          %v2525 = vpop.f32.mrb[0].mxu0
          %v2526 = vadd.f32 0.0, %v2525
          %v2527 = vpop.f32.mrb[0].mxu0
          %v2528 = vadd.f32 0.0, %v2527
          %v2529 = vpop.f32.mrb[0].mxu0
          %v2530 = vadd.f32 0.0, %v2529
          %v2531 = vpop.f32.mrb[0].mxu0
          %v2532 = vadd.f32 0.0, %v2531
          %2533 = vmatprep.mubr.bf16.mxu0 0
          %2534 = vmatmul.mubr.bf16.gmra.mrb[0].mxu0 %v2387
          %v2535 = vpop.f32.mrb[0].mxu0
          %v2536 = vadd.f32 0.0, %v2535
          %v2537 = vpop.f32.mrb[0].mxu0
          %v2538 = vadd.f32 0.0, %v2537
          %v2539 = vpop.f32.mrb[0].mxu0
          %v2540 = vadd.f32 0.0, %v2539
          %v2541 = vpop.f32.mrb[0].mxu0
          %v2542 = vadd.f32 0.0, %v2541
          %2543 = vmatprep.mubr.bf16.mxu0 0
          %2544 = vmatmul.mubr.bf16.gmra.mrb[0].mxu0 %v2388
          %v2545 = vpop.f32.mrb[0].mxu0
          %v2546 = vadd.f32 0.0, %v2545
          %v2547 = vpop.f32.mrb[0].mxu0
          %v2548 = vadd.f32 0.0, %v2547
          %v2549 = vpop.f32.mrb[0].mxu0
          %v2550 = vadd.f32 0.0, %v2549
          %v2551 = vpop.f32.mrb[0].mxu0
          %v2552 = vadd.f32 0.0, %v2551
          %2553 = vmatprep.mubr.bf16.mxu0 0
          %2554 = vmatmul.mubr.bf16.gmra.mrb[0].mxu0 %v2389
          %v2555 = vpop.f32.mrb[0].mxu0
          %v2556 = vadd.f32 0.0, %v2555
          %v2557 = vpop.f32.mrb[0].mxu0
          %v2558 = vadd.f32 0.0, %v2557
          %v2559 = vpop.f32.mrb[0].mxu0
          %v2560 = vadd.f32 0.0, %v2559
          %v2561 = vpop.f32.mrb[0].mxu0
          %v2562 = vadd.f32 0.0, %v2561
          %2563 = vmatprep.mubr.bf16.mxu0 0
          %2564 = vmatmul.mubr.bf16.gmra.mrb[0].mxu0 %v2390
          %v2565 = vpop.f32.mrb[0].mxu0
          %v2566 = vadd.f32 0.0, %v2565
          %v2567 = vpop.f32.mrb[0].mxu0
          %v2568 = vadd.f32 0.0, %v2567
          %v2569 = vpop.f32.mrb[0].mxu0
          %v2570 = vadd.f32 0.0, %v2569
          %v2571 = vpop.f32.mrb[0].mxu0
          %v2572 = vadd.f32 0.0, %v2571
          %2573 = vmatprep.mubr.bf16.mxu0 0
          %2574 = vmatmul.mubr.bf16.gmra.mrb[0].mxu0 %v2391
          %v2575 = vpop.f32.mrb[0].mxu0
          %v2576 = vadd.f32 0.0, %v2575
          %v2577 = vpop.f32.mrb[0].mxu0
          %v2578 = vadd.f32 0.0, %v2577
          %v2579 = vpop.f32.mrb[0].mxu0
          %v2580 = vadd.f32 0.0, %v2579
          %v2581 = vpop.f32.mrb[0].mxu0
          %v2582 = vadd.f32 0.0, %v2581
          %2583 = vmatprep.mubr.bf16.mxu0 0
          %2584 = vmatmul.mubr.bf16.gmra.mrb[0].mxu0 %v2392
          %v2585 = vpop.f32.mrb[0].mxu0
          %v2586 = vadd.f32 0.0, %v2585
          %v2587 = vpop.f32.mrb[0].mxu0
          %v2588 = vadd.f32 0.0, %v2587
          %v2589 = vpop.f32.mrb[0].mxu0
          %v2590 = vadd.f32 0.0, %v2589
          %v2591 = vpop.f32.mrb[0].mxu0
          %v2592 = vadd.f32 0.0, %v2591
          %2593 = vmatprep.mubr.bf16.mxu0 0
          %2594 = vmatmul.mubr.bf16.gmra.mrb[0].mxu0 %v2393
          %v2595 = vpop.f32.mrb[0].mxu0
          %v2596 = vadd.f32 0.0, %v2595
          %v2597 = vpop.f32.mrb[0].mxu0
          %v2598 = vadd.f32 0.0, %v2597
          %v2599 = vpop.f32.mrb[0].mxu0
          %v2600 = vadd.f32 0.0, %v2599
          %v2601 = vpop.f32.mrb[0].mxu0
          %v2602 = vadd.f32 0.0, %v2601
          %2603 = vdwg.mxu0
          %v2620 = vunpack.c.l.b16 %v2369
          %v2621 = vunpack.c.h.b16 %v2369
          %v2622 = vunpack.c.l.b16 %v2370
          %v2623 = vunpack.c.h.b16 %v2370
          %v2624 = vunpack.c.l.b16 %v2371
          %v2625 = vunpack.c.h.b16 %v2371
          %v2626 = vunpack.c.l.b16 %v2372
          %v2627 = vunpack.c.h.b16 %v2372
          %v2628 = vunpack.c.l.b16 %v2373
          %v2629 = vunpack.c.h.b16 %v2373
          %v2630 = vunpack.c.l.b16 %v2374
          %v2631 = vunpack.c.h.b16 %v2374
          %v2632 = vunpack.c.l.b16 %v2375
          %v2633 = vunpack.c.h.b16 %v2375
          %v2634 = vunpack.c.l.b16 %v2376
          %v2635 = vunpack.c.h.b16 %v2376
          %v2636 = vunpack.c.l.b16 %v2377
          %v2637 = vunpack.c.h.b16 %v2377
          %v2638 = vunpack.c.l.b16 %v2378
          %v2639 = vunpack.c.h.b16 %v2378
          %v2640 = vunpack.c.l.b16 %v2379
          %v2641 = vunpack.c.h.b16 %v2379
          %v2642 = vunpack.c.l.b16 %v2380
          %v2643 = vunpack.c.h.b16 %v2380
          %v2644 = vunpack.c.l.b16 %v2381
          %v2645 = vunpack.c.h.b16 %v2381
          %v2646 = vunpack.c.l.b16 %v2382
          %v2647 = vunpack.c.h.b16 %v2382
          %v2648 = vunpack.c.l.b16 %v2383
          %v2649 = vunpack.c.h.b16 %v2383
          %v2650 = vunpack.c.l.b16 %v2384
          %v2651 = vunpack.c.h.b16 %v2384
          %v2652 = vpack.c.b16 %v2622, %v2620
          %v2653 = vpack.c.b16 %v2623, %v2621
          %v2654 = vpack.c.b16 %v2626, %v2624
          %v2655 = vpack.c.b16 %v2627, %v2625
          %v2656 = vpack.c.b16 %v2630, %v2628
          %v2657 = vpack.c.b16 %v2631, %v2629
          %v2658 = vpack.c.b16 %v2634, %v2632
          %v2659 = vpack.c.b16 %v2635, %v2633
          %v2660 = vpack.c.b16 %v2638, %v2636
          %v2661 = vpack.c.b16 %v2639, %v2637
          %v2662 = vpack.c.b16 %v2642, %v2640
          %v2663 = vpack.c.b16 %v2643, %v2641
          %v2664 = vpack.c.b16 %v2646, %v2644
          %v2665 = vpack.c.b16 %v2647, %v2645
          %v2666 = vpack.c.b16 %v2650, %v2648
          %v2667 = vpack.c.b16 %v2651, %v2649
          %2684 = vmatprep.subr.bf16.mxu0 %v2653
          %2685 = vmatpush1.bf16.msra.mxu0 %v2652
          %2686 = vmatprep.subr.bf16.mxu0 %v2655
          %2687 = vmatpush1.bf16.msra.mxu0 %v2654
          %2688 = vmatprep.subr.bf16.mxu0 %v2657
          %2689 = vmatpush1.bf16.msra.mxu0 %v2656
          %2690 = vmatprep.subr.bf16.mxu0 %v2659
          %2691 = vmatpush1.bf16.msra.mxu0 %v2658
          %2692 = vmatprep.subr.bf16.mxu0 %v2661
          %2693 = vmatpush1.bf16.msra.mxu0 %v2660
          %2694 = vmatprep.subr.bf16.mxu0 %v2663
          %2695 = vmatpush1.bf16.msra.mxu0 %v2662
          %2696 = vmatprep.subr.bf16.mxu0 %v2665
          %2697 = vmatpush1.bf16.msra.mxu0 %v2664
          %2698 = vmatprep.subr.bf16.mxu0 %v2667
          %2699 = vmatpush1.bf16.msra.mxu0 %v2666
          %2700 = vmatprep.subr.bf16.mxu0 0
          %2701 = vmatpush1.bf16.msra.mxu0 0
          %2702 = vmatprep.subr.bf16.mxu0 0
          %2703 = vmatpush1.bf16.msra.mxu0 0
          %2704 = vmatprep.subr.bf16.mxu0 0
          %2705 = vmatpush1.bf16.msra.mxu0 0
          %2706 = vmatprep.subr.bf16.mxu0 0
          %2707 = vmatpush1.bf16.msra.mxu0 0
          %2708 = vmatprep.subr.bf16.mxu0 0
          %2709 = vmatpush1.bf16.msra.mxu0 0
          %2710 = vmatprep.subr.bf16.mxu0 0
          %2711 = vmatpush1.bf16.msra.mxu0 0
          %2712 = vmatprep.subr.bf16.mxu0 0
          %2713 = vmatpush1.bf16.msra.mxu0 0
          %2714 = vmatprep.subr.bf16.mxu0 0
          %2715 = vmatpush1.bf16.msra.mxu0 0
          %2716 = vmatprep.mubr.bf16.mxu0 0
          %2717 = vmatmul.mubr.bf16.gmra.mrb[0].mxu0 %v2361
          %v2718 = vpop.f32.mrb[0].mxu0
          %v2719 = vadd.f32 %v2526, %v2718
          %v2720 = vpop.f32.mrb[0].mxu0
          %v2721 = vadd.f32 %v2528, %v2720
          %v2722 = vpop.f32.mrb[0].mxu0
          %v2723 = vadd.f32 %v2530, %v2722
          %v2724 = vpop.f32.mrb[0].mxu0
          %v2725 = vadd.f32 %v2532, %v2724
          %2726 = vmatprep.mubr.bf16.mxu0 0
          %2727 = vmatmul.mubr.bf16.gmra.mrb[0].mxu0 %v2362
          %v2728 = vpop.f32.mrb[0].mxu0
          %v2729 = vadd.f32 %v2536, %v2728
          %v2730 = vpop.f32.mrb[0].mxu0
          %v2731 = vadd.f32 %v2538, %v2730
          %v2732 = vpop.f32.mrb[0].mxu0
          %v2733 = vadd.f32 %v2540, %v2732
          %v2734 = vpop.f32.mrb[0].mxu0
          %v2735 = vadd.f32 %v2542, %v2734
          %2736 = vmatprep.mubr.bf16.mxu0 0
          %2737 = vmatmul.mubr.bf16.gmra.mrb[0].mxu0 %v2363
          %v2738 = vpop.f32.mrb[0].mxu0
          %v2739 = vadd.f32 %v2546, %v2738
          %v2740 = vpop.f32.mrb[0].mxu0
          %v2741 = vadd.f32 %v2548, %v2740
          %v2742 = vpop.f32.mrb[0].mxu0
          %v2743 = vadd.f32 %v2550, %v2742
          %v2744 = vpop.f32.mrb[0].mxu0
          %v2745 = vadd.f32 %v2552, %v2744
          %2746 = vmatprep.mubr.bf16.mxu0 0
          %2747 = vmatmul.mubr.bf16.gmra.mrb[0].mxu0 %v2364
          %v2748 = vpop.f32.mrb[0].mxu0
          %v2749 = vadd.f32 %v2556, %v2748
          %v2750 = vpop.f32.mrb[0].mxu0
          %v2751 = vadd.f32 %v2558, %v2750
          %v2752 = vpop.f32.mrb[0].mxu0
          %v2753 = vadd.f32 %v2560, %v2752
          %v2754 = vpop.f32.mrb[0].mxu0
          %v2755 = vadd.f32 %v2562, %v2754
          %2756 = vmatprep.mubr.bf16.mxu0 0
          %2757 = vmatmul.mubr.bf16.gmra.mrb[0].mxu0 %v2365
          %v2758 = vpop.f32.mrb[0].mxu0
          %v2759 = vadd.f32 %v2566, %v2758
          %v2760 = vpop.f32.mrb[0].mxu0
          %v2761 = vadd.f32 %v2568, %v2760
          %v2762 = vpop.f32.mrb[0].mxu0
          %v2763 = vadd.f32 %v2570, %v2762
          %v2764 = vpop.f32.mrb[0].mxu0
          %v2765 = vadd.f32 %v2572, %v2764
          %2766 = vmatprep.mubr.bf16.mxu0 0
          %2767 = vmatmul.mubr.bf16.gmra.mrb[0].mxu0 %v2366
          %v2768 = vpop.f32.mrb[0].mxu0
          %v2769 = vadd.f32 %v2576, %v2768
          %v2770 = vpop.f32.mrb[0].mxu0
          %v2771 = vadd.f32 %v2578, %v2770
          %v2772 = vpop.f32.mrb[0].mxu0
          %v2773 = vadd.f32 %v2580, %v2772
          %v2774 = vpop.f32.mrb[0].mxu0
          %v2775 = vadd.f32 %v2582, %v2774
          %2776 = vmatprep.mubr.bf16.mxu0 0
          %2777 = vmatmul.mubr.bf16.gmra.mrb[0].mxu0 %v2367
          %v2778 = vpop.f32.mrb[0].mxu0
          %v2779 = vadd.f32 %v2586, %v2778
          %v2780 = vpop.f32.mrb[0].mxu0
          %v2781 = vadd.f32 %v2588, %v2780
          %v2782 = vpop.f32.mrb[0].mxu0
          %v2783 = vadd.f32 %v2590, %v2782
          %v2784 = vpop.f32.mrb[0].mxu0
          %v2785 = vadd.f32 %v2592, %v2784
          %2786 = vmatprep.mubr.bf16.mxu0 0
          %2787 = vmatmul.mubr.bf16.gmra.mrb[0].mxu0 %v2368
          %v2788 = vpop.f32.mrb[0].mxu0
          %v2789 = vadd.f32 %v2596, %v2788
          %v2790 = vpop.f32.mrb[0].mxu0
          %v2791 = vadd.f32 %v2598, %v2790
          %v2792 = vpop.f32.mrb[0].mxu0
          %v2793 = vadd.f32 %v2600, %v2792
          %v2794 = vpop.f32.mrb[0].mxu0
          %v2795 = vadd.f32 %v2602, %v2794
          %2796 = vdwg.mxu0
          %v2797 = vld [vmem:[%s7] sm:$0x3]
          %v2799 = vlaneseq
          %v2800 = vshrl.u32 %v2799, 7
          %v2801 = vsub.s32 0, %v2800
          %v2802 = vrot.slane %v2797, %v2801
          %v2803 = vlaneseq
          %v2804 = vshrl.u32 %v2803, 7
          %v2805 = vsub.s32 1, %v2804
          %v2806 = vrot.slane %v2797, %v2805
          %v2809 = vadd.f32 %v2719, %v2802
          %v2810 = vadd.f32 %v2721, %v2806
          %v2811 = vadd.f32 %v2723, %v2802
          %v2812 = vadd.f32 %v2725, %v2806
          %v2813 = vadd.f32 %v2729, %v2802
          %v2814 = vadd.f32 %v2731, %v2806
          %v2815 = vadd.f32 %v2733, %v2802
          %v2816 = vadd.f32 %v2735, %v2806
          %v2817 = vadd.f32 %v2739, %v2802
          %v2818 = vadd.f32 %v2741, %v2806
          %v2819 = vadd.f32 %v2743, %v2802
          %v2820 = vadd.f32 %v2745, %v2806
          %v2821 = vadd.f32 %v2749, %v2802
          %v2822 = vadd.f32 %v2751, %v2806
          %v2823 = vadd.f32 %v2753, %v2802
          %v2824 = vadd.f32 %v2755, %v2806
          %v2825 = vadd.f32 %v2759, %v2802
          %v2826 = vadd.f32 %v2761, %v2806
          %v2827 = vadd.f32 %v2763, %v2802
          %v2828 = vadd.f32 %v2765, %v2806
          %v2829 = vadd.f32 %v2769, %v2802
          %v2830 = vadd.f32 %v2771, %v2806
          %v2831 = vadd.f32 %v2773, %v2802
          %v2832 = vadd.f32 %v2775, %v2806
          %v2833 = vadd.f32 %v2779, %v2802
          %v2834 = vadd.f32 %v2781, %v2806
          %v2835 = vadd.f32 %v2783, %v2802
          %v2836 = vadd.f32 %v2785, %v2806
          %v2837 = vadd.f32 %v2789, %v2802
          %v2838 = vadd.f32 %v2791, %v2806
          %v2839 = vadd.f32 %v2793, %v2802
          %v2840 = vadd.f32 %v2795, %v2806
          %2841 = vst [vmem:[%s388] sm:$0xff] %v2809
          %2842 = vst [vmem:[%s388 + $0x8] sm:$0xff] %v2810
          %2843 = vst [vmem:[%s388 + $0x10] sm:$0xff] %v2811
          %2844 = vst [vmem:[%s388 + $0x18] sm:$0xff] %v2812
          %2845 = vst [vmem:[%s388 + $0x20] sm:$0xff] %v2813
          %2846 = vst [vmem:[%s388 + $0x28] sm:$0xff] %v2814
          %2847 = vst [vmem:[%s388 + $0x30] sm:$0xff] %v2815
          %2848 = vst [vmem:[%s388 + $0x38] sm:$0xff] %v2816
          %2849 = vst [vmem:[%s388 + $0x40] sm:$0xff] %v2817
          %2850 = vst [vmem:[%s388 + $0x48] sm:$0xff] %v2818
          %2851 = vst [vmem:[%s388 + $0x50] sm:$0xff] %v2819
          %2852 = vst [vmem:[%s388 + $0x58] sm:$0xff] %v2820
          %2853 = vst [vmem:[%s388 + $0x60] sm:$0xff] %v2821
          %2854 = vst [vmem:[%s388 + $0x68] sm:$0xff] %v2822
          %2855 = vst [vmem:[%s388 + $0x70] sm:$0xff] %v2823
          %2856 = vst [vmem:[%s388 + $0x78] sm:$0xff] %v2824
          %2857 = vst [vmem:[%s388 + $0x80] sm:$0xff] %v2825
          %2858 = vst [vmem:[%s388 + $0x88] sm:$0xff] %v2826
          %2859 = vst [vmem:[%s388 + $0x90] sm:$0xff] %v2827
          %2860 = vst [vmem:[%s388 + $0x98] sm:$0xff] %v2828
          %2861 = vst [vmem:[%s388 + $0xa0] sm:$0xff] %v2829
          %2862 = vst [vmem:[%s388 + $0xa8] sm:$0xff] %v2830
          %2863 = vst [vmem:[%s388 + $0xb0] sm:$0xff] %v2831
          %2864 = vst [vmem:[%s388 + $0xb8] sm:$0xff] %v2832
          %2865 = vst [vmem:[%s388 + $0xc0] sm:$0xff] %v2833
          %2866 = vst [vmem:[%s388 + $0xc8] sm:$0xff] %v2834
          %2867 = vst [vmem:[%s388 + $0xd0] sm:$0xff] %v2835
          %2868 = vst [vmem:[%s388 + $0xd8] sm:$0xff] %v2836
          %2869 = vst [vmem:[%s388 + $0xe0] sm:$0xff] %v2837
          %2870 = vst [vmem:[%s388 + $0xe8] sm:$0xff] %v2838
          %2871 = vst [vmem:[%s388 + $0xf0] sm:$0xff] %v2839
          %2872 = vst [vmem:[%s388 + $0xf8] sm:$0xff] %v2840
        $region76: #{tpu_custom_call.1} parent=51 // pred_fallthru
          _
        %s2873 = sand.u32 %s225, 1
        %s2874 = scalar_lea.sflag [#allocation6], %s2873
        %s2875 = sand.u32 %s225, 1
        %s2876 = smul.addr %s2875, 256
        %s2877 = scalar_lea.vmem [#allocation12], %s2876
        // Predicated region
        $region77: #{tpu_custom_call.1} parent=51 // pred_check
          %p2878 = pneg %p235
        $region78: #{tpu_custom_call.1} parent=51 // pred_check_branch
          %2880 = sbr.rel (%p2878) target = $region80
        $region79: #{tpu_custom_call.1} parent=51 // pred_region
          %s2882 = ssub.s32 4096, 4096
          %2883 = vsyncadd %s2874, %s2882
          %s2884 = smul.addr %s31, 32
          %s2885 = smul.addr %s2884, 128
          %s2886 = scalar_lea.hbm %s8, %s2885
          %s2887 = sshll.u32 %s2877, 4
          %s2888 = int_to_ptr.vmem [resolvable:$true] %s2887
          %2893 = dma.vmem_to_hbm [thread:$0]  %s2888, 4096, %s2886, %s2874, 256, 256, 16
        $region80: #{tpu_custom_call.1} parent=51 // pred_fallthru
          _
      $region52: #{tpu_custom_call.1} parent=5 // pred_fallthru
        _
      %p2894 = scmp.le.s32.totalorder 2, %s22
      // Predicated region
      $region81: #{tpu_custom_call.1} parent=5 // pred_check
        %p2895 = pneg %p2894
      $region82: #{tpu_custom_call.1} parent=5 // pred_check_branch
        %2897 = sbr.rel (%p2895) target = $region84
      $region83: #{tpu_custom_call.1} parent=5 // pred_region
        %s2898 = ssub.s32 %s22, 2
        // Predicated region
        $region85: #{tpu_custom_call.1} parent=83 // pred_check
          %p2899 = pneg %p241
        $region86: #{tpu_custom_call.1} parent=83 // pred_check_branch
          %2901 = sbr.rel (%p2899) target = $region88
        $region87: #{tpu_custom_call.1} parent=83 // pred_region
          %s2902 = sand.u32 %s226, 1
          %s2903 = scalar_lea.sflag [#allocation6], %s2902
          %s2904 = sand.u32 %s226, 1
          %s2905 = smul.addr %s2904, 256
          %s2906 = scalar_lea.vmem [#allocation12], %s2905
          %2907 = dma.done %s2903, 4096
        $region88: #{tpu_custom_call.1} parent=83 // pred_fallthru
          _
      $region84: #{tpu_custom_call.1} parent=5 // pred_fallthru
        _
    $region6: #{tpu_custom_call.1} parent=1 // loop_footer
      %s26 = sadd.s32 1, %s22
    $region7: #{tpu_custom_call.1} parent=1 // loop_footer_branch
      %21 = sbr.rel target = $region3
    $region8: #{tpu_custom_call.1} parent=1 // loop_exit
      _
    %2908 = vsyncpa [#allocation5], 1
    %s2909 = scalar_lea.sflag [#allocation5], 1
    %2910 = vsyncpa %s2909, 1
    %2911 = vsyncpa [#allocation8], 1
    %2912 = vsyncpa [#allocation11], 1
    %2913 = vsyncpa [#allocation6], 1
    %s2914 = scalar_lea.sflag [#allocation6], 1
    %2915 = vsyncpa %s2914, 1

</llo_original>
